<compile_context>
chip_gen: v7x
topology: tpu7x:2x2x1
jax: 0.10.0
libtpu: 0.0.40
codegen_flags: <defaults>
</compile_context>

<pallas_src>
import math

import jax
import jax.numpy as jnp
from jax.experimental import pallas as pl
from jax.experimental.pallas import tpu as pltpu

# ----------------------------- tiny BERT config -----------------------------
BATCH = 2
SEQ = 8
HIDDEN = 32
NUM_HEADS = 2
HEAD_DIM = HIDDEN // NUM_HEADS
INTERMEDIATE = 64
NUM_LAYERS = 2
VOCAB = 128
TYPE_VOCAB = 2
MAX_POS = 16
LN_EPS = 1e-12
NEG_INF = -1e9


# ------------------------------ shared math ---------------------------------
def _layernorm(x, g, b):
    mu = jnp.mean(x, axis=-1, keepdims=True)
    var = jnp.mean((x - mu) * (x - mu), axis=-1, keepdims=True)
    return (x - mu) * jax.lax.rsqrt(var + LN_EPS) * g + b


def _gelu(x):
    # TODO(synk): HF BERT uses exact erf-GELU; tanh approximation used here
    # (tanh runs on the otherwise-idle EUP slot). Reference uses the same.
    return 0.5 * x * (1.0 + jnp.tanh(0.7978845608028654 * (x + 0.044715 * x * x * x)))


# ------------------------------ fused kernel --------------------------------
def _encoder_kernel(
    emb_ref,                        # [B*S, H]  f32 (summed embeddings, pre-LN)
    mask_ref,                       # [B*NH, 1, S] f32 additive attention bias
    emb_g_ref, emb_b_ref,           # [1, H] f32
    wqkv_ref,                       # [L, H, 3H]  bf16  (cols = [q | k | v], heads contiguous)
    bqkv_ref,                       # [L, 1, 3H]  f32   lane-dense
    wo_ref,                         # [L, H, H]   bf16
    bo_ref,                         # [L, 1, H]   f32
    ln1_g_ref, ln1_b_ref,           # [L, 1, H]   f32
    w1_ref, b1_ref,                 # [L, H, I] bf16, [L, 1, I] f32
    w2_ref, b2_ref,                 # [L, I, H] bf16, [L, 1, H] f32
    ln2_g_ref, ln2_b_ref,           # [L, 1, H]   f32
    pool_w_ref, pool_b_ref,         # [H, H] bf16, [1, H] f32
    out_ref,                        # [B, H]  f32
):
    scale = 1.0 / math.sqrt(HEAD_DIM)
    bf16 = jnp.bfloat16

    x = _layernorm(emb_ref[...], emb_g_ref[...], emb_b_ref[...])   # [B*S, H] f32
    mask_bias = mask_ref[...]                                       # [B*NH, 1, S]

    # TODO(synk): switch to lax.fori_loop over the stacked [L, ...] weight refs
    # if NUM_LAYERS grows beyond a couple (bounds the live weight vreg set).
    for l in range(NUM_LAYERS):
        # ---- fused QKV: one lane-dense [B*S, H] x [H, 3H] MXU push ----
        qkv = jnp.dot(x.astype(bf16), wqkv_ref[l],
                      preferred_element_type=jnp.float32) + bqkv_ref[l]   # [B*S, 3H]

        # ---- split into per-(batch, head) [S, D] tiles -> [B*NH, S, D] ----
        def head_stack(col_base):
            return jnp.stack(
                [qkv[b * SEQ:(b + 1) * SEQ,
                     col_base + h * HEAD_DIM: col_base + (h + 1) * HEAD_DIM]
                 for b in range(BATCH) for h in range(NUM_HEADS)],
                axis=0)
        q = head_stack(0)               # [B*NH, S, D] f32
        k = head_stack(HIDDEN)
        v = head_stack(2 * HIDDEN)

        # ---- attention, batched over B*NH heads, no K transpose ----
        s = jnp.einsum("nqd,nkd->nqk", q.astype(bf16), k.astype(bf16),
                       preferred_element_type=jnp.float32) * scale
        s = s + mask_bias                                        # [B*NH, S, S]
        s = s - jnp.max(s, axis=-1, keepdims=True)
        p = jnp.exp(s)
        p = p * pl.reciprocal(jnp.sum(p, axis=-1, keepdims=True), approx=True)
        ctx = jnp.einsum("nqk,nkd->nqd", p.astype(bf16), v.astype(bf16),
                         preferred_element_type=jnp.float32)     # [B*NH, S, D]

        # ---- fold heads back to [B*S, H] and do ONE output projection ----
        attn_in = jnp.concatenate(
            [jnp.concatenate([ctx[b * NUM_HEADS + h] for h in range(NUM_HEADS)],
                             axis=1)
             for b in range(BATCH)],
            axis=0)                                              # [B*S, H]
        attn = jnp.dot(attn_in.astype(bf16), wo_ref[l],
                       preferred_element_type=jnp.float32) + bo_ref[l]
        x = _layernorm(attn + x, ln1_g_ref[l], ln1_b_ref[l])

        # ---- feed-forward ----
        ff = _gelu(jnp.dot(x.astype(bf16), w1_ref[l],
                           preferred_element_type=jnp.float32) + b1_ref[l])
        ffo = jnp.dot(ff.astype(bf16), w2_ref[l],
                      preferred_element_type=jnp.float32) + b2_ref[l]
        x = _layernorm(ffo + x, ln2_g_ref[l], ln2_b_ref[l])

    # ---- pooler on the CLS (first-token) rows ----
    cls = jnp.concatenate([x[b * SEQ:b * SEQ + 1, :] for b in range(BATCH)],
                          axis=0)                                # [B, H]
    pooled = jnp.tanh(jnp.dot(cls.astype(bf16), pool_w_ref[...],
                              preferred_element_type=jnp.float32)
                      + pool_b_ref[...])
    out_ref[...] = pooled.astype(out_ref.dtype)


# ---------------------- host-side weight packing (glue) ----------------------
def _prep_weights(params):
    bf16 = lambda w: w.astype(jnp.bfloat16)
    H, I = HIDDEN, INTERMEDIATE

    wqkv, bqkv, wo, bo = [], [], [], []
    ln1g, ln1b, w1, b1, w2, b2, ln2g, ln2b = [], [], [], [], [], [], [], []
    for lp in params["layers"]:
        wqkv.append(jnp.concatenate([lp["wq"], lp["wk"], lp["wv"]], axis=1))   # [H, 3H]
        bqkv.append(jnp.concatenate([lp["bq"], lp["bk"], lp["bv"]], 0).reshape(1, 3 * H))
        wo.append(lp["wo"])                                                    # [H, H]
        bo.append(lp["bo"].reshape(1, H))
        ln1g.append(lp["ln1_g"].reshape(1, H))
        ln1b.append(lp["ln1_b"].reshape(1, H))
        w1.append(lp["w1"])
        b1.append(lp["b1"].reshape(1, I))
        w2.append(lp["w2"])
        b2.append(lp["b2"].reshape(1, H))
        ln2g.append(lp["ln2_g"].reshape(1, H))
        ln2b.append(lp["ln2_b"].reshape(1, H))

    stk = lambda xs: jnp.stack(xs, 0)
    return (
        params["emb_ln_g"].reshape(1, H),
        params["emb_ln_b"].reshape(1, H),
        bf16(stk(wqkv)), stk(bqkv),
        bf16(stk(wo)), stk(bo),
        stk(ln1g), stk(ln1b),
        bf16(stk(w1)), stk(b1),
        bf16(stk(w2)), stk(b2),
        stk(ln2g), stk(ln2b),
        bf16(params["pooler_w"]), params["pooler_b"].reshape(1, H),
    )


def _additive_mask(attention_mask):
    # [B, S] {0,1} -> additive bias [B, S]
    return (1.0 - attention_mask.astype(jnp.float32)) * NEG_INF


def _mask_bias_for_kernel(attention_mask):
    bias = _additive_mask(attention_mask)                       # [B, S]
    bias = jnp.repeat(bias[:, None, :], NUM_HEADS, axis=1)      # [B, NH, S]
    return bias.reshape(BATCH * NUM_HEADS, 1, SEQ)


# ------------------------------ kernel wrapper -------------------------------
def bert_encoder_pallas(emb2d, mask_bias, weights):
    vmem = lambda: pl.BlockSpec(memory_space=pltpu.MemorySpace.VMEM)
    n_in = 2 + len(weights)
    return pl.pallas_call(
        _encoder_kernel,
        out_shape=jax.ShapeDtypeStruct((BATCH, HIDDEN), jnp.float32),
        in_specs=[vmem() for _ in range(n_in)],
        out_specs=vmem(),
    )(emb2d, mask_bias, *weights)


# ------------------------------ parameter init -------------------------------
def init_params(key):
    std = 0.02

    def nrm(k, shape):
        return std * jax.random.normal(k, shape, dtype=jnp.float32)

    keys = iter(jax.random.split(key, 16 + NUM_LAYERS * 16))
    params = {
        "word_emb": nrm(next(keys), (VOCAB, HIDDEN)),
        "pos_emb": nrm(next(keys), (MAX_POS, HIDDEN)),
        "type_emb": nrm(next(keys), (TYPE_VOCAB, HIDDEN)),
        "emb_ln_g": jnp.ones((HIDDEN,), jnp.float32),
        "emb_ln_b": jnp.zeros((HIDDEN,), jnp.float32),
    }
    layers = []
    for _ in range(NUM_LAYERS):
        lp = {
            "wq": nrm(next(keys), (HIDDEN, HIDDEN)), "bq": jnp.zeros((HIDDEN,), jnp.float32),
            "wk": nrm(next(keys), (HIDDEN, HIDDEN)), "bk": jnp.zeros((HIDDEN,), jnp.float32),
            "wv": nrm(next(keys), (HIDDEN, HIDDEN)), "bv": jnp.zeros((HIDDEN,), jnp.float32),
            "wo": nrm(next(keys), (HIDDEN, HIDDEN)), "bo": jnp.zeros((HIDDEN,), jnp.float32),
            "ln1_g": jnp.ones((HIDDEN,), jnp.float32), "ln1_b": jnp.zeros((HIDDEN,), jnp.float32),
            "w1": nrm(next(keys), (HIDDEN, INTERMEDIATE)), "b1": jnp.zeros((INTERMEDIATE,), jnp.float32),
            "w2": nrm(next(keys), (INTERMEDIATE, HIDDEN)), "b2": jnp.zeros((HIDDEN,), jnp.float32),
            "ln2_g": jnp.ones((HIDDEN,), jnp.float32), "ln2_b": jnp.zeros((HIDDEN,), jnp.float32),
        }
        layers.append(lp)
    params["layers"] = layers
    params["pooler_w"] = nrm(next(keys), (HIDDEN, HIDDEN))
    params["pooler_b"] = jnp.zeros((HIDDEN,), jnp.float32)
    return params


# --------------------------------- forward ----------------------------------
def bert_forward(params, input_ids, token_type_ids, attention_mask):
    B, S = input_ids.shape
    # Embedding gathers are glue (jnp indexing); everything else runs in the
    # single fused Pallas kernel.
    emb = (
        params["word_emb"][input_ids]
        + params["pos_emb"][jnp.arange(S)][None, :, :]
        + params["type_emb"][token_type_ids]
    ).astype(jnp.float32)
    emb2d = emb.reshape(B * S, HIDDEN)
    weights = _prep_weights(params)
    mask_bias = _mask_bias_for_kernel(attention_mask)
    return bert_encoder_pallas(emb2d, mask_bias, weights)


# --------------------------- pure-JAX reference ------------------------------
def _reference_forward(params, input_ids, token_type_ids, attention_mask):
    B, S = input_ids.shape
    emb = (
        params["word_emb"][input_ids]
        + params["pos_emb"][jnp.arange(S)][None, :, :]
        + params["type_emb"][token_type_ids]
    ).astype(jnp.float32)

    bias = _additive_mask(attention_mask)                        # [B, S]

    x = _layernorm(emb.reshape(B * S, HIDDEN), params["emb_ln_g"], params["emb_ln_b"])
    for lp in params["layers"]:
        q = (x @ lp["wq"] + lp["bq"]).reshape(B, S, NUM_HEADS, HEAD_DIM).transpose(0, 2, 1, 3)
        k = (x @ lp["wk"] + lp["bk"]).reshape(B, S, NUM_HEADS, HEAD_DIM).transpose(0, 2, 1, 3)
        v = (x @ lp["wv"] + lp["bv"]).reshape(B, S, NUM_HEADS, HEAD_DIM).transpose(0, 2, 1, 3)
        s = jnp.einsum("bhqd,bhkd->bhqk", q, k) / math.sqrt(HEAD_DIM)
        s = s + bias[:, None, None, :]
        p = jax.nn.softmax(s, axis=-1)
        ctx = jnp.einsum("bhqk,bhkd->bhqd", p, v).transpose(0, 2, 1, 3).reshape(B * S, HIDDEN)
        x = _layernorm(ctx @ lp["wo"] + lp["bo"] + x, lp["ln1_g"], lp["ln1_b"])
        ff = _gelu(x @ lp["w1"] + lp["b1"])
        x = _layernorm(ff @ lp["w2"] + lp["b2"] + x, lp["ln2_g"], lp["ln2_b"])
    cls = x.reshape(B, S, HIDDEN)[:, 0, :]
    return jnp.tanh(cls @ params["pooler_w"] + params["pooler_b"])


if __name__ == "__main__":
    # TODO(synk): BertTokenizer string tokenization and pretrained-checkpoint
    # loading are host-side / IO with no Pallas equivalent; integer token ids,
    # a padding attention_mask, and deterministic synthetic weights are used.
    key = jax.random.PRNGKey(0)
    k_param, k_ids = jax.random.split(key)
    params = init_params(k_param)

    input_ids = jax.random.randint(k_ids, (BATCH, SEQ), 0, VOCAB, dtype=jnp.int32)
    token_type_ids = jnp.zeros((BATCH, SEQ), dtype=jnp.int32)
    # Second batch element has two padded positions to exercise the mask path.
    attention_mask = jnp.ones((BATCH, SEQ), jnp.float32).at[1, SEQ - 2:].set(0.0)

    pooled = jax.jit(bert_forward)(params, input_ids, token_type_ids, attention_mask)
    pooled = jax.block_until_ready(pooled)
    assert pooled.shape == (BATCH, HIDDEN) and pooled.dtype == jnp.float32

    with jax.default_matmul_precision("highest"):
        ref = _reference_forward(params, input_ids, token_type_ids, attention_mask)
    max_err = float(jnp.max(jnp.abs(pooled - ref)))
    # Tolerance accounts for bf16 MXU operands (f32 accumulation) vs f32 reference.
    assert max_err < 2e-2, f"mismatch vs reference: {max_err}"

    print("KERNEL_OK")
</pallas_src>

<mosaic_0001>
module attributes {stable_mosaic.version = 11 : i64} {
  func.func @_encoder_kernel(%arg0: memref<16x32xf32, #tpu.memory_space<vmem>>, %arg1: memref<4x1x8xf32, #tpu.memory_space<vmem>>, %arg2: memref<1x32xf32, #tpu.memory_space<vmem>>, %arg3: memref<1x32xf32, #tpu.memory_space<vmem>>, %arg4: memref<2x32x96xbf16, #tpu.memory_space<vmem>>, %arg5: memref<2x1x96xf32, #tpu.memory_space<vmem>>, %arg6: memref<2x32x32xbf16, #tpu.memory_space<vmem>>, %arg7: memref<2x1x32xf32, #tpu.memory_space<vmem>>, %arg8: memref<2x1x32xf32, #tpu.memory_space<vmem>>, %arg9: memref<2x1x32xf32, #tpu.memory_space<vmem>>, %arg10: memref<2x32x64xbf16, #tpu.memory_space<vmem>>, %arg11: memref<2x1x64xf32, #tpu.memory_space<vmem>>, %arg12: memref<2x64x32xbf16, #tpu.memory_space<vmem>>, %arg13: memref<2x1x32xf32, #tpu.memory_space<vmem>>, %arg14: memref<2x1x32xf32, #tpu.memory_space<vmem>>, %arg15: memref<2x1x32xf32, #tpu.memory_space<vmem>>, %arg16: memref<32x32xbf16, #tpu.memory_space<vmem>>, %arg17: memref<1x32xf32, #tpu.memory_space<vmem>>, %arg18: memref<2x32xf32, #tpu.memory_space<vmem>>) attributes {dimension_semantics = [], scalar_prefetch = 0 : i64, scratch_operands = 0 : i64, tpu.core_type = #tpu.core_type<tc>} {
    %c0 = arith.constant 0 : index
    %c0_0 = arith.constant 0 : index
    %0 = vector.load %arg0[%c0, %c0_0] : memref<16x32xf32, #tpu.memory_space<vmem>>, vector<16x32xf32>
    %c0_1 = arith.constant 0 : index
    %c0_2 = arith.constant 0 : index
    %1 = vector.load %arg2[%c0_1, %c0_2] : memref<1x32xf32, #tpu.memory_space<vmem>>, vector<1x32xf32>
    %c0_3 = arith.constant 0 : index
    %c0_4 = arith.constant 0 : index
    %2 = vector.load %arg3[%c0_3, %c0_4] : memref<1x32xf32, #tpu.memory_space<vmem>>, vector<1x32xf32>
    %cst = arith.constant dense<0.000000e+00> : vector<16xf32>
    %3 = vector.multi_reduction <add>, %0, %cst [1] : vector<16x32xf32> to vector<16xf32>
    %4 = vector.shape_cast %3 : vector<16xf32> to vector<16x1xf32>
    %cst_5 = arith.constant 3.200000e+01 : f32
    %5 = vector.broadcast %cst_5 : f32 to vector<16x1xf32>
    %6 = arith.divf %4, %5 : vector<16x1xf32>
    %7 = vector.broadcast %6 : vector<16x1xf32> to vector<16x32xf32>
    %8 = arith.subf %0, %7 : vector<16x32xf32>
    %9 = vector.broadcast %6 : vector<16x1xf32> to vector<16x32xf32>
    %10 = arith.subf %0, %9 : vector<16x32xf32>
    %11 = arith.mulf %8, %10 : vector<16x32xf32>
    %cst_6 = arith.constant dense<0.000000e+00> : vector<16xf32>
    %12 = vector.multi_reduction <add>, %11, %cst_6 [1] : vector<16x32xf32> to vector<16xf32>
    %13 = vector.shape_cast %12 : vector<16xf32> to vector<16x1xf32>
    %cst_7 = arith.constant 3.200000e+01 : f32
    %14 = vector.broadcast %cst_7 : f32 to vector<16x1xf32>
    %15 = arith.divf %13, %14 : vector<16x1xf32>
    %16 = vector.broadcast %6 : vector<16x1xf32> to vector<16x32xf32>
    %17 = arith.subf %0, %16 : vector<16x32xf32>
    %cst_8 = arith.constant 9.99999996E-13 : f32
    %18 = vector.broadcast %cst_8 : f32 to vector<16x1xf32>
    %19 = arith.addf %15, %18 : vector<16x1xf32>
    %20 = math.rsqrt %19 : vector<16x1xf32>
    %21 = vector.broadcast %20 : vector<16x1xf32> to vector<16x32xf32>
    %22 = arith.mulf %17, %21 : vector<16x32xf32>
    %23 = vector.broadcast %1 : vector<1x32xf32> to vector<16x32xf32>
    %24 = arith.mulf %22, %23 : vector<16x32xf32>
    %25 = vector.broadcast %2 : vector<1x32xf32> to vector<16x32xf32>
    %26 = arith.addf %24, %25 : vector<16x32xf32>
    %c0_9 = arith.constant 0 : index
    %c0_10 = arith.constant 0 : index
    %c0_11 = arith.constant 0 : index
    %27 = vector.load %arg1[%c0_9, %c0_10, %c0_11] : memref<4x1x8xf32, #tpu.memory_space<vmem>>, vector<4x1x8xf32>
    %28 = arith.truncf %26 : vector<16x32xf32> to vector<16x32xbf16>
    %c0_12 = arith.constant 0 : index
    %c0_13 = arith.constant 0 : index
    %c0_14 = arith.constant 0 : index
    %29 = vector.load %arg4[%c0_12, %c0_13, %c0_14] : memref<2x32x96xbf16, #tpu.memory_space<vmem>>, vector<1x32x96xbf16>
    %30 = vector.shape_cast %29 : vector<1x32x96xbf16> to vector<32x96xbf16>
    %cst_15 = arith.constant dense<0.000000e+00> : vector<16x96xf32>
    %31 = tpu.matmul %28, %30, %cst_15 {dimension_numbers = #tpu.dot_dimension_numbers<[1], [0], [0], [1], [0, 0, 1, 1], [], []>} : vector<16x32xbf16>, vector<32x96xbf16>, vector<16x96xf32> -> vector<16x96xf32>
    %c0_16 = arith.constant 0 : index
    %c0_17 = arith.constant 0 : index
    %c0_18 = arith.constant 0 : index
    %32 = vector.load %arg5[%c0_16, %c0_17, %c0_18] : memref<2x1x96xf32, #tpu.memory_space<vmem>>, vector<1x1x96xf32>
    %33 = vector.shape_cast %32 : vector<1x1x96xf32> to vector<1x96xf32>
    %34 = vector.broadcast %33 : vector<1x96xf32> to vector<16x96xf32>
    %35 = arith.addf %31, %34 : vector<16x96xf32>
    %36 = vector.extract_strided_slice %35 {offsets = [0, 0], sizes = [8, 16], strides = [1, 1]} : vector<16x96xf32> to vector<8x16xf32>
    %37 = vector.extract_strided_slice %35 {offsets = [0, 16], sizes = [8, 16], strides = [1, 1]} : vector<16x96xf32> to vector<8x16xf32>
    %38 = vector.extract_strided_slice %35 {offsets = [8, 0], sizes = [8, 16], strides = [1, 1]} : vector<16x96xf32> to vector<8x16xf32>
    %39 = vector.extract_strided_slice %35 {offsets = [8, 16], sizes = [8, 16], strides = [1, 1]} : vector<16x96xf32> to vector<8x16xf32>
    %40 = vector.shape_cast %36 : vector<8x16xf32> to vector<1x8x16xf32>
    %41 = vector.shape_cast %37 : vector<8x16xf32> to vector<1x8x16xf32>
    %42 = vector.shape_cast %38 : vector<8x16xf32> to vector<1x8x16xf32>
    %43 = vector.shape_cast %39 : vector<8x16xf32> to vector<1x8x16xf32>
    %44 = tpu.concatenate %40, %41, %42, %43 in 0 : vector<1x8x16xf32>, vector<1x8x16xf32>, vector<1x8x16xf32>, vector<1x8x16xf32> -> vector<4x8x16xf32>
    %45 = vector.extract_strided_slice %35 {offsets = [0, 32], sizes = [8, 16], strides = [1, 1]} : vector<16x96xf32> to vector<8x16xf32>
    %46 = vector.extract_strided_slice %35 {offsets = [0, 48], sizes = [8, 16], strides = [1, 1]} : vector<16x96xf32> to vector<8x16xf32>
    %47 = vector.extract_strided_slice %35 {offsets = [8, 32], sizes = [8, 16], strides = [1, 1]} : vector<16x96xf32> to vector<8x16xf32>
    %48 = vector.extract_strided_slice %35 {offsets = [8, 48], sizes = [8, 16], strides = [1, 1]} : vector<16x96xf32> to vector<8x16xf32>
    %49 = vector.shape_cast %45 : vector<8x16xf32> to vector<1x8x16xf32>
    %50 = vector.shape_cast %46 : vector<8x16xf32> to vector<1x8x16xf32>
    %51 = vector.shape_cast %47 : vector<8x16xf32> to vector<1x8x16xf32>
    %52 = vector.shape_cast %48 : vector<8x16xf32> to vector<1x8x16xf32>
    %53 = tpu.concatenate %49, %50, %51, %52 in 0 : vector<1x8x16xf32>, vector<1x8x16xf32>, vector<1x8x16xf32>, vector<1x8x16xf32> -> vector<4x8x16xf32>
    %54 = vector.extract_strided_slice %35 {offsets = [0, 64], sizes = [8, 16], strides = [1, 1]} : vector<16x96xf32> to vector<8x16xf32>
    %55 = vector.extract_strided_slice %35 {offsets = [0, 80], sizes = [8, 16], strides = [1, 1]} : vector<16x96xf32> to vector<8x16xf32>
    %56 = vector.extract_strided_slice %35 {offsets = [8, 64], sizes = [8, 16], strides = [1, 1]} : vector<16x96xf32> to vector<8x16xf32>
    %57 = vector.extract_strided_slice %35 {offsets = [8, 80], sizes = [8, 16], strides = [1, 1]} : vector<16x96xf32> to vector<8x16xf32>
    %58 = vector.shape_cast %54 : vector<8x16xf32> to vector<1x8x16xf32>
    %59 = vector.shape_cast %55 : vector<8x16xf32> to vector<1x8x16xf32>
    %60 = vector.shape_cast %56 : vector<8x16xf32> to vector<1x8x16xf32>
    %61 = vector.shape_cast %57 : vector<8x16xf32> to vector<1x8x16xf32>
    %62 = tpu.concatenate %58, %59, %60, %61 in 0 : vector<1x8x16xf32>, vector<1x8x16xf32>, vector<1x8x16xf32>, vector<1x8x16xf32> -> vector<4x8x16xf32>
    %63 = arith.truncf %44 : vector<4x8x16xf32> to vector<4x8x16xbf16>
    %64 = arith.truncf %53 : vector<4x8x16xf32> to vector<4x8x16xbf16>
    "tpu.trace_start"() <{level = 10 : i32, message = "nqd,nkd->nqk"}> : () -> ()
    %cst_19 = arith.constant dense<0.000000e+00> : vector<4x8x8xf32>
    %65 = tpu.matmul %63, %64, %cst_19 {dimension_numbers = #tpu.dot_dimension_numbers<[2], [2], [1], [1], [0, 0, 0, 1, 1, 1], [0], [0]>} : vector<4x8x16xbf16>, vector<4x8x16xbf16>, vector<4x8x8xf32> -> vector<4x8x8xf32>
    "tpu.trace_stop"() : () -> ()
    %cst_20 = arith.constant 2.500000e-01 : f32
    %66 = vector.broadcast %cst_20 : f32 to vector<4x8x8xf32>
    %67 = arith.mulf %65, %66 : vector<4x8x8xf32>
    %68 = vector.broadcast %27 : vector<4x1x8xf32> to vector<4x8x8xf32>
    %69 = arith.addf %67, %68 : vector<4x8x8xf32>
    %cst_21 = arith.constant dense<0xFF800000> : vector<4x8xf32>
    %70 = vector.multi_reduction <maximumf>, %69, %cst_21 [2] : vector<4x8x8xf32> to vector<4x8xf32>
    %71 = vector.shape_cast %70 : vector<4x8xf32> to vector<4x8x1xf32>
    %72 = vector.broadcast %71 : vector<4x8x1xf32> to vector<4x8x8xf32>
    %73 = arith.subf %69, %72 : vector<4x8x8xf32>
    %74 = math.exp %73 : vector<4x8x8xf32>
    %cst_22 = arith.constant dense<0.000000e+00> : vector<4x8xf32>
    %75 = vector.multi_reduction <add>, %74, %cst_22 [2] : vector<4x8x8xf32> to vector<4x8xf32>
    %76 = vector.shape_cast %75 : vector<4x8xf32> to vector<4x8x1xf32>
    %77 = tpu.reciprocal %76 {approx = true} : vector<4x8x1xf32> -> vector<4x8x1xf32>
    %78 = vector.broadcast %77 : vector<4x8x1xf32> to vector<4x8x8xf32>
    %79 = arith.mulf %74, %78 : vector<4x8x8xf32>
    %80 = arith.truncf %79 : vector<4x8x8xf32> to vector<4x8x8xbf16>
    %81 = arith.truncf %62 : vector<4x8x16xf32> to vector<4x8x16xbf16>
    "tpu.trace_start"() <{level = 10 : i32, message = "nqk,nkd->nqd"}> : () -> ()
    %cst_23 = arith.constant dense<0.000000e+00> : vector<4x8x16xf32>
    %82 = tpu.matmul %80, %81, %cst_23 {dimension_numbers = #tpu.dot_dimension_numbers<[2], [1], [1], [2], [0, 0, 0, 1, 1, 2], [0], [0]>} : vector<4x8x8xbf16>, vector<4x8x16xbf16>, vector<4x8x16xf32> -> vector<4x8x16xf32>
    "tpu.trace_stop"() : () -> ()
    %83 = vector.extract_strided_slice %82 {offsets = [0, 0, 0], sizes = [1, 8, 16], strides = [1, 1, 1]} : vector<4x8x16xf32> to vector<1x8x16xf32>
    %84 = vector.shape_cast %83 : vector<1x8x16xf32> to vector<8x16xf32>
    %85 = vector.extract_strided_slice %82 {offsets = [1, 0, 0], sizes = [1, 8, 16], strides = [1, 1, 1]} : vector<4x8x16xf32> to vector<1x8x16xf32>
    %86 = vector.shape_cast %85 : vector<1x8x16xf32> to vector<8x16xf32>
    %87 = tpu.concatenate %84, %86 in 1 : vector<8x16xf32>, vector<8x16xf32> -> vector<8x32xf32>
    %88 = vector.extract_strided_slice %82 {offsets = [2, 0, 0], sizes = [1, 8, 16], strides = [1, 1, 1]} : vector<4x8x16xf32> to vector<1x8x16xf32>
    %89 = vector.shape_cast %88 : vector<1x8x16xf32> to vector<8x16xf32>
    %90 = vector.extract_strided_slice %82 {offsets = [3, 0, 0], sizes = [1, 8, 16], strides = [1, 1, 1]} : vector<4x8x16xf32> to vector<1x8x16xf32>
    %91 = vector.shape_cast %90 : vector<1x8x16xf32> to vector<8x16xf32>
    %92 = tpu.concatenate %89, %91 in 1 : vector<8x16xf32>, vector<8x16xf32> -> vector<8x32xf32>
    %93 = tpu.concatenate %87, %92 in 0 : vector<8x32xf32>, vector<8x32xf32> -> vector<16x32xf32>
    %94 = arith.truncf %93 : vector<16x32xf32> to vector<16x32xbf16>
    %c0_24 = arith.constant 0 : index
    %c0_25 = arith.constant 0 : index
    %c0_26 = arith.constant 0 : index
    %95 = vector.load %arg6[%c0_24, %c0_25, %c0_26] : memref<2x32x32xbf16, #tpu.memory_space<vmem>>, vector<1x32x32xbf16>
    %96 = vector.shape_cast %95 : vector<1x32x32xbf16> to vector<32x32xbf16>
    %cst_27 = arith.constant dense<0.000000e+00> : vector<16x32xf32>
    %97 = tpu.matmul %94, %96, %cst_27 {dimension_numbers = #tpu.dot_dimension_numbers<[1], [0], [0], [1], [0, 0, 1, 1], [], []>} : vector<16x32xbf16>, vector<32x32xbf16>, vector<16x32xf32> -> vector<16x32xf32>
    %c0_28 = arith.constant 0 : index
    %c0_29 = arith.constant 0 : index
    %c0_30 = arith.constant 0 : index
    %98 = vector.load %arg7[%c0_28, %c0_29, %c0_30] : memref<2x1x32xf32, #tpu.memory_space<vmem>>, vector<1x1x32xf32>
    %99 = vector.shape_cast %98 : vector<1x1x32xf32> to vector<1x32xf32>
    %100 = vector.broadcast %99 : vector<1x32xf32> to vector<16x32xf32>
    %101 = arith.addf %97, %100 : vector<16x32xf32>
    %102 = arith.addf %101, %26 : vector<16x32xf32>
    %c0_31 = arith.constant 0 : index
    %c0_32 = arith.constant 0 : index
    %c0_33 = arith.constant 0 : index
    %103 = vector.load %arg8[%c0_31, %c0_32, %c0_33] : memref<2x1x32xf32, #tpu.memory_space<vmem>>, vector<1x1x32xf32>
    %104 = vector.shape_cast %103 : vector<1x1x32xf32> to vector<1x32xf32>
    %c0_34 = arith.constant 0 : index
    %c0_35 = arith.constant 0 : index
    %c0_36 = arith.constant 0 : index
    %105 = vector.load %arg9[%c0_34, %c0_35, %c0_36] : memref<2x1x32xf32, #tpu.memory_space<vmem>>, vector<1x1x32xf32>
    %106 = vector.shape_cast %105 : vector<1x1x32xf32> to vector<1x32xf32>
    %cst_37 = arith.constant dense<0.000000e+00> : vector<16xf32>
    %107 = vector.multi_reduction <add>, %102, %cst_37 [1] : vector<16x32xf32> to vector<16xf32>
    %108 = vector.shape_cast %107 : vector<16xf32> to vector<16x1xf32>
    %cst_38 = arith.constant 3.200000e+01 : f32
    %109 = vector.broadcast %cst_38 : f32 to vector<16x1xf32>
    %110 = arith.divf %108, %109 : vector<16x1xf32>
    %111 = vector.broadcast %110 : vector<16x1xf32> to vector<16x32xf32>
    %112 = arith.subf %102, %111 : vector<16x32xf32>
    %113 = vector.broadcast %110 : vector<16x1xf32> to vector<16x32xf32>
    %114 = arith.subf %102, %113 : vector<16x32xf32>
    %115 = arith.mulf %112, %114 : vector<16x32xf32>
    %cst_39 = arith.constant dense<0.000000e+00> : vector<16xf32>
    %116 = vector.multi_reduction <add>, %115, %cst_39 [1] : vector<16x32xf32> to vector<16xf32>
    %117 = vector.shape_cast %116 : vector<16xf32> to vector<16x1xf32>
    %cst_40 = arith.constant 3.200000e+01 : f32
    %118 = vector.broadcast %cst_40 : f32 to vector<16x1xf32>
    %119 = arith.divf %117, %118 : vector<16x1xf32>
    %120 = vector.broadcast %110 : vector<16x1xf32> to vector<16x32xf32>
    %121 = arith.subf %102, %120 : vector<16x32xf32>
    %cst_41 = arith.constant 9.99999996E-13 : f32
    %122 = vector.broadcast %cst_41 : f32 to vector<16x1xf32>
    %123 = arith.addf %119, %122 : vector<16x1xf32>
    %124 = math.rsqrt %123 : vector<16x1xf32>
    %125 = vector.broadcast %124 : vector<16x1xf32> to vector<16x32xf32>
    %126 = arith.mulf %121, %125 : vector<16x32xf32>
    %127 = vector.broadcast %104 : vector<1x32xf32> to vector<16x32xf32>
    %128 = arith.mulf %126, %127 : vector<16x32xf32>
    %129 = vector.broadcast %106 : vector<1x32xf32> to vector<16x32xf32>
    %130 = arith.addf %128, %129 : vector<16x32xf32>
    %131 = arith.truncf %130 : vector<16x32xf32> to vector<16x32xbf16>
    %c0_42 = arith.constant 0 : index
    %c0_43 = arith.constant 0 : index
    %c0_44 = arith.constant 0 : index
    %132 = vector.load %arg10[%c0_42, %c0_43, %c0_44] : memref<2x32x64xbf16, #tpu.memory_space<vmem>>, vector<1x32x64xbf16>
    %133 = vector.shape_cast %132 : vector<1x32x64xbf16> to vector<32x64xbf16>
    %cst_45 = arith.constant dense<0.000000e+00> : vector<16x64xf32>
    %134 = tpu.matmul %131, %133, %cst_45 {dimension_numbers = #tpu.dot_dimension_numbers<[1], [0], [0], [1], [0, 0, 1, 1], [], []>} : vector<16x32xbf16>, vector<32x64xbf16>, vector<16x64xf32> -> vector<16x64xf32>
    %c0_46 = arith.constant 0 : index
    %c0_47 = arith.constant 0 : index
    %c0_48 = arith.constant 0 : index
    %135 = vector.load %arg11[%c0_46, %c0_47, %c0_48] : memref<2x1x64xf32, #tpu.memory_space<vmem>>, vector<1x1x64xf32>
    %136 = vector.shape_cast %135 : vector<1x1x64xf32> to vector<1x64xf32>
    %137 = vector.broadcast %136 : vector<1x64xf32> to vector<16x64xf32>
    %138 = arith.addf %134, %137 : vector<16x64xf32>
    %cst_49 = arith.constant 5.000000e-01 : f32
    %139 = vector.broadcast %cst_49 : f32 to vector<16x64xf32>
    %140 = arith.mulf %139, %138 : vector<16x64xf32>
    %cst_50 = arith.constant 4.471500e-02 : f32
    %141 = vector.broadcast %cst_50 : f32 to vector<16x64xf32>
    %142 = arith.mulf %141, %138 : vector<16x64xf32>
    %143 = arith.mulf %142, %138 : vector<16x64xf32>
    %144 = arith.mulf %143, %138 : vector<16x64xf32>
    %145 = arith.addf %138, %144 : vector<16x64xf32>
    %cst_51 = arith.constant 0.797884583 : f32
    %146 = vector.broadcast %cst_51 : f32 to vector<16x64xf32>
    %147 = arith.mulf %146, %145 : vector<16x64xf32>
    %148 = math.tanh %147 : vector<16x64xf32>
    %cst_52 = arith.constant 1.000000e+00 : f32
    %149 = vector.broadcast %cst_52 : f32 to vector<16x64xf32>
    %150 = arith.addf %149, %148 : vector<16x64xf32>
    %151 = arith.mulf %140, %150 : vector<16x64xf32>
    %152 = arith.truncf %151 : vector<16x64xf32> to vector<16x64xbf16>
    %c0_53 = arith.constant 0 : index
    %c0_54 = arith.constant 0 : index
    %c0_55 = arith.constant 0 : index
    %153 = vector.load %arg12[%c0_53, %c0_54, %c0_55] : memref<2x64x32xbf16, #tpu.memory_space<vmem>>, vector<1x64x32xbf16>
    %154 = vector.shape_cast %153 : vector<1x64x32xbf16> to vector<64x32xbf16>
    %cst_56 = arith.constant dense<0.000000e+00> : vector<16x32xf32>
    %155 = tpu.matmul %152, %154, %cst_56 {dimension_numbers = #tpu.dot_dimension_numbers<[1], [0], [0], [1], [0, 0, 1, 1], [], []>} : vector<16x64xbf16>, vector<64x32xbf16>, vector<16x32xf32> -> vector<16x32xf32>
    %c0_57 = arith.constant 0 : index
    %c0_58 = arith.constant 0 : index
    %c0_59 = arith.constant 0 : index
    %156 = vector.load %arg13[%c0_57, %c0_58, %c0_59] : memref<2x1x32xf32, #tpu.memory_space<vmem>>, vector<1x1x32xf32>
    %157 = vector.shape_cast %156 : vector<1x1x32xf32> to vector<1x32xf32>
    %158 = vector.broadcast %157 : vector<1x32xf32> to vector<16x32xf32>
    %159 = arith.addf %155, %158 : vector<16x32xf32>
    %160 = arith.addf %159, %130 : vector<16x32xf32>
    %c0_60 = arith.constant 0 : index
    %c0_61 = arith.constant 0 : index
    %c0_62 = arith.constant 0 : index
    %161 = vector.load %arg14[%c0_60, %c0_61, %c0_62] : memref<2x1x32xf32, #tpu.memory_space<vmem>>, vector<1x1x32xf32>
    %162 = vector.shape_cast %161 : vector<1x1x32xf32> to vector<1x32xf32>
    %c0_63 = arith.constant 0 : index
    %c0_64 = arith.constant 0 : index
    %c0_65 = arith.constant 0 : index
    %163 = vector.load %arg15[%c0_63, %c0_64, %c0_65] : memref<2x1x32xf32, #tpu.memory_space<vmem>>, vector<1x1x32xf32>
    %164 = vector.shape_cast %163 : vector<1x1x32xf32> to vector<1x32xf32>
    %cst_66 = arith.constant dense<0.000000e+00> : vector<16xf32>
    %165 = vector.multi_reduction <add>, %160, %cst_66 [1] : vector<16x32xf32> to vector<16xf32>
    %166 = vector.shape_cast %165 : vector<16xf32> to vector<16x1xf32>
    %cst_67 = arith.constant 3.200000e+01 : f32
    %167 = vector.broadcast %cst_67 : f32 to vector<16x1xf32>
    %168 = arith.divf %166, %167 : vector<16x1xf32>
    %169 = vector.broadcast %168 : vector<16x1xf32> to vector<16x32xf32>
    %170 = arith.subf %160, %169 : vector<16x32xf32>
    %171 = vector.broadcast %168 : vector<16x1xf32> to vector<16x32xf32>
    %172 = arith.subf %160, %171 : vector<16x32xf32>
    %173 = arith.mulf %170, %172 : vector<16x32xf32>
    %cst_68 = arith.constant dense<0.000000e+00> : vector<16xf32>
    %174 = vector.multi_reduction <add>, %173, %cst_68 [1] : vector<16x32xf32> to vector<16xf32>
    %175 = vector.shape_cast %174 : vector<16xf32> to vector<16x1xf32>
    %cst_69 = arith.constant 3.200000e+01 : f32
    %176 = vector.broadcast %cst_69 : f32 to vector<16x1xf32>
    %177 = arith.divf %175, %176 : vector<16x1xf32>
    %178 = vector.broadcast %168 : vector<16x1xf32> to vector<16x32xf32>
    %179 = arith.subf %160, %178 : vector<16x32xf32>
    %cst_70 = arith.constant 9.99999996E-13 : f32
    %180 = vector.broadcast %cst_70 : f32 to vector<16x1xf32>
    %181 = arith.addf %177, %180 : vector<16x1xf32>
    %182 = math.rsqrt %181 : vector<16x1xf32>
    %183 = vector.broadcast %182 : vector<16x1xf32> to vector<16x32xf32>
    %184 = arith.mulf %179, %183 : vector<16x32xf32>
    %185 = vector.broadcast %162 : vector<1x32xf32> to vector<16x32xf32>
    %186 = arith.mulf %184, %185 : vector<16x32xf32>
    %187 = vector.broadcast %164 : vector<1x32xf32> to vector<16x32xf32>
    %188 = arith.addf %186, %187 : vector<16x32xf32>
    %189 = arith.truncf %188 : vector<16x32xf32> to vector<16x32xbf16>
    %c1 = arith.constant 1 : index
    %c0_71 = arith.constant 0 : index
    %c0_72 = arith.constant 0 : index
    %190 = vector.load %arg4[%c1, %c0_71, %c0_72] : memref<2x32x96xbf16, #tpu.memory_space<vmem>>, vector<1x32x96xbf16>
    %191 = vector.shape_cast %190 : vector<1x32x96xbf16> to vector<32x96xbf16>
    %cst_73 = arith.constant dense<0.000000e+00> : vector<16x96xf32>
    %192 = tpu.matmul %189, %191, %cst_73 {dimension_numbers = #tpu.dot_dimension_numbers<[1], [0], [0], [1], [0, 0, 1, 1], [], []>} : vector<16x32xbf16>, vector<32x96xbf16>, vector<16x96xf32> -> vector<16x96xf32>
    %c1_74 = arith.constant 1 : index
    %c0_75 = arith.constant 0 : index
    %c0_76 = arith.constant 0 : index
    %193 = vector.load %arg5[%c1_74, %c0_75, %c0_76] : memref<2x1x96xf32, #tpu.memory_space<vmem>>, vector<1x1x96xf32>
    %194 = vector.shape_cast %193 : vector<1x1x96xf32> to vector<1x96xf32>
    %195 = vector.broadcast %194 : vector<1x96xf32> to vector<16x96xf32>
    %196 = arith.addf %192, %195 : vector<16x96xf32>
    %197 = vector.extract_strided_slice %196 {offsets = [0, 0], sizes = [8, 16], strides = [1, 1]} : vector<16x96xf32> to vector<8x16xf32>
    %198 = vector.extract_strided_slice %196 {offsets = [0, 16], sizes = [8, 16], strides = [1, 1]} : vector<16x96xf32> to vector<8x16xf32>
    %199 = vector.extract_strided_slice %196 {offsets = [8, 0], sizes = [8, 16], strides = [1, 1]} : vector<16x96xf32> to vector<8x16xf32>
    %200 = vector.extract_strided_slice %196 {offsets = [8, 16], sizes = [8, 16], strides = [1, 1]} : vector<16x96xf32> to vector<8x16xf32>
    %201 = vector.shape_cast %197 : vector<8x16xf32> to vector<1x8x16xf32>
    %202 = vector.shape_cast %198 : vector<8x16xf32> to vector<1x8x16xf32>
    %203 = vector.shape_cast %199 : vector<8x16xf32> to vector<1x8x16xf32>
    %204 = vector.shape_cast %200 : vector<8x16xf32> to vector<1x8x16xf32>
    %205 = tpu.concatenate %201, %202, %203, %204 in 0 : vector<1x8x16xf32>, vector<1x8x16xf32>, vector<1x8x16xf32>, vector<1x8x16xf32> -> vector<4x8x16xf32>
    %206 = vector.extract_strided_slice %196 {offsets = [0, 32], sizes = [8, 16], strides = [1, 1]} : vector<16x96xf32> to vector<8x16xf32>
    %207 = vector.extract_strided_slice %196 {offsets = [0, 48], sizes = [8, 16], strides = [1, 1]} : vector<16x96xf32> to vector<8x16xf32>
    %208 = vector.extract_strided_slice %196 {offsets = [8, 32], sizes = [8, 16], strides = [1, 1]} : vector<16x96xf32> to vector<8x16xf32>
    %209 = vector.extract_strided_slice %196 {offsets = [8, 48], sizes = [8, 16], strides = [1, 1]} : vector<16x96xf32> to vector<8x16xf32>
    %210 = vector.shape_cast %206 : vector<8x16xf32> to vector<1x8x16xf32>
    %211 = vector.shape_cast %207 : vector<8x16xf32> to vector<1x8x16xf32>
    %212 = vector.shape_cast %208 : vector<8x16xf32> to vector<1x8x16xf32>
    %213 = vector.shape_cast %209 : vector<8x16xf32> to vector<1x8x16xf32>
    %214 = tpu.concatenate %210, %211, %212, %213 in 0 : vector<1x8x16xf32>, vector<1x8x16xf32>, vector<1x8x16xf32>, vector<1x8x16xf32> -> vector<4x8x16xf32>
    %215 = vector.extract_strided_slice %196 {offsets = [0, 64], sizes = [8, 16], strides = [1, 1]} : vector<16x96xf32> to vector<8x16xf32>
    %216 = vector.extract_strided_slice %196 {offsets = [0, 80], sizes = [8, 16], strides = [1, 1]} : vector<16x96xf32> to vector<8x16xf32>
    %217 = vector.extract_strided_slice %196 {offsets = [8, 64], sizes = [8, 16], strides = [1, 1]} : vector<16x96xf32> to vector<8x16xf32>
    %218 = vector.extract_strided_slice %196 {offsets = [8, 80], sizes = [8, 16], strides = [1, 1]} : vector<16x96xf32> to vector<8x16xf32>
    %219 = vector.shape_cast %215 : vector<8x16xf32> to vector<1x8x16xf32>
    %220 = vector.shape_cast %216 : vector<8x16xf32> to vector<1x8x16xf32>
    %221 = vector.shape_cast %217 : vector<8x16xf32> to vector<1x8x16xf32>
    %222 = vector.shape_cast %218 : vector<8x16xf32> to vector<1x8x16xf32>
    %223 = tpu.concatenate %219, %220, %221, %222 in 0 : vector<1x8x16xf32>, vector<1x8x16xf32>, vector<1x8x16xf32>, vector<1x8x16xf32> -> vector<4x8x16xf32>
    %224 = arith.truncf %205 : vector<4x8x16xf32> to vector<4x8x16xbf16>
    %225 = arith.truncf %214 : vector<4x8x16xf32> to vector<4x8x16xbf16>
    "tpu.trace_start"() <{level = 10 : i32, message = "nqd,nkd->nqk"}> : () -> ()
    %cst_77 = arith.constant dense<0.000000e+00> : vector<4x8x8xf32>
    %226 = tpu.matmul %224, %225, %cst_77 {dimension_numbers = #tpu.dot_dimension_numbers<[2], [2], [1], [1], [0, 0, 0, 1, 1, 1], [0], [0]>} : vector<4x8x16xbf16>, vector<4x8x16xbf16>, vector<4x8x8xf32> -> vector<4x8x8xf32>
    "tpu.trace_stop"() : () -> ()
    %cst_78 = arith.constant 2.500000e-01 : f32
    %227 = vector.broadcast %cst_78 : f32 to vector<4x8x8xf32>
    %228 = arith.mulf %226, %227 : vector<4x8x8xf32>
    %229 = vector.broadcast %27 : vector<4x1x8xf32> to vector<4x8x8xf32>
    %230 = arith.addf %228, %229 : vector<4x8x8xf32>
    %cst_79 = arith.constant dense<0xFF800000> : vector<4x8xf32>
    %231 = vector.multi_reduction <maximumf>, %230, %cst_79 [2] : vector<4x8x8xf32> to vector<4x8xf32>
    %232 = vector.shape_cast %231 : vector<4x8xf32> to vector<4x8x1xf32>
    %233 = vector.broadcast %232 : vector<4x8x1xf32> to vector<4x8x8xf32>
    %234 = arith.subf %230, %233 : vector<4x8x8xf32>
    %235 = math.exp %234 : vector<4x8x8xf32>
    %cst_80 = arith.constant dense<0.000000e+00> : vector<4x8xf32>
    %236 = vector.multi_reduction <add>, %235, %cst_80 [2] : vector<4x8x8xf32> to vector<4x8xf32>
    %237 = vector.shape_cast %236 : vector<4x8xf32> to vector<4x8x1xf32>
    %238 = tpu.reciprocal %237 {approx = true} : vector<4x8x1xf32> -> vector<4x8x1xf32>
    %239 = vector.broadcast %238 : vector<4x8x1xf32> to vector<4x8x8xf32>
    %240 = arith.mulf %235, %239 : vector<4x8x8xf32>
    %241 = arith.truncf %240 : vector<4x8x8xf32> to vector<4x8x8xbf16>
    %242 = arith.truncf %223 : vector<4x8x16xf32> to vector<4x8x16xbf16>
    "tpu.trace_start"() <{level = 10 : i32, message = "nqk,nkd->nqd"}> : () -> ()
    %cst_81 = arith.constant dense<0.000000e+00> : vector<4x8x16xf32>
    %243 = tpu.matmul %241, %242, %cst_81 {dimension_numbers = #tpu.dot_dimension_numbers<[2], [1], [1], [2], [0, 0, 0, 1, 1, 2], [0], [0]>} : vector<4x8x8xbf16>, vector<4x8x16xbf16>, vector<4x8x16xf32> -> vector<4x8x16xf32>
    "tpu.trace_stop"() : () -> ()
    %244 = vector.extract_strided_slice %243 {offsets = [0, 0, 0], sizes = [1, 8, 16], strides = [1, 1, 1]} : vector<4x8x16xf32> to vector<1x8x16xf32>
    %245 = vector.shape_cast %244 : vector<1x8x16xf32> to vector<8x16xf32>
    %246 = vector.extract_strided_slice %243 {offsets = [1, 0, 0], sizes = [1, 8, 16], strides = [1, 1, 1]} : vector<4x8x16xf32> to vector<1x8x16xf32>
    %247 = vector.shape_cast %246 : vector<1x8x16xf32> to vector<8x16xf32>
    %248 = tpu.concatenate %245, %247 in 1 : vector<8x16xf32>, vector<8x16xf32> -> vector<8x32xf32>
    %249 = vector.extract_strided_slice %243 {offsets = [2, 0, 0], sizes = [1, 8, 16], strides = [1, 1, 1]} : vector<4x8x16xf32> to vector<1x8x16xf32>
    %250 = vector.shape_cast %249 : vector<1x8x16xf32> to vector<8x16xf32>
    %251 = vector.extract_strided_slice %243 {offsets = [3, 0, 0], sizes = [1, 8, 16], strides = [1, 1, 1]} : vector<4x8x16xf32> to vector<1x8x16xf32>
    %252 = vector.shape_cast %251 : vector<1x8x16xf32> to vector<8x16xf32>
    %253 = tpu.concatenate %250, %252 in 1 : vector<8x16xf32>, vector<8x16xf32> -> vector<8x32xf32>
    %254 = tpu.concatenate %248, %253 in 0 : vector<8x32xf32>, vector<8x32xf32> -> vector<16x32xf32>
    %255 = arith.truncf %254 : vector<16x32xf32> to vector<16x32xbf16>
    %c1_82 = arith.constant 1 : index
    %c0_83 = arith.constant 0 : index
    %c0_84 = arith.constant 0 : index
    %256 = vector.load %arg6[%c1_82, %c0_83, %c0_84] : memref<2x32x32xbf16, #tpu.memory_space<vmem>>, vector<1x32x32xbf16>
    %257 = vector.shape_cast %256 : vector<1x32x32xbf16> to vector<32x32xbf16>
    %cst_85 = arith.constant dense<0.000000e+00> : vector<16x32xf32>
    %258 = tpu.matmul %255, %257, %cst_85 {dimension_numbers = #tpu.dot_dimension_numbers<[1], [0], [0], [1], [0, 0, 1, 1], [], []>} : vector<16x32xbf16>, vector<32x32xbf16>, vector<16x32xf32> -> vector<16x32xf32>
    %c1_86 = arith.constant 1 : index
    %c0_87 = arith.constant 0 : index
    %c0_88 = arith.constant 0 : index
    %259 = vector.load %arg7[%c1_86, %c0_87, %c0_88] : memref<2x1x32xf32, #tpu.memory_space<vmem>>, vector<1x1x32xf32>
    %260 = vector.shape_cast %259 : vector<1x1x32xf32> to vector<1x32xf32>
    %261 = vector.broadcast %260 : vector<1x32xf32> to vector<16x32xf32>
    %262 = arith.addf %258, %261 : vector<16x32xf32>
    %263 = arith.addf %262, %188 : vector<16x32xf32>
    %c1_89 = arith.constant 1 : index
    %c0_90 = arith.constant 0 : index
    %c0_91 = arith.constant 0 : index
    %264 = vector.load %arg8[%c1_89, %c0_90, %c0_91] : memref<2x1x32xf32, #tpu.memory_space<vmem>>, vector<1x1x32xf32>
    %265 = vector.shape_cast %264 : vector<1x1x32xf32> to vector<1x32xf32>
    %c1_92 = arith.constant 1 : index
    %c0_93 = arith.constant 0 : index
    %c0_94 = arith.constant 0 : index
    %266 = vector.load %arg9[%c1_92, %c0_93, %c0_94] : memref<2x1x32xf32, #tpu.memory_space<vmem>>, vector<1x1x32xf32>
    %267 = vector.shape_cast %266 : vector<1x1x32xf32> to vector<1x32xf32>
    %cst_95 = arith.constant dense<0.000000e+00> : vector<16xf32>
    %268 = vector.multi_reduction <add>, %263, %cst_95 [1] : vector<16x32xf32> to vector<16xf32>
    %269 = vector.shape_cast %268 : vector<16xf32> to vector<16x1xf32>
    %cst_96 = arith.constant 3.200000e+01 : f32
    %270 = vector.broadcast %cst_96 : f32 to vector<16x1xf32>
    %271 = arith.divf %269, %270 : vector<16x1xf32>
    %272 = vector.broadcast %271 : vector<16x1xf32> to vector<16x32xf32>
    %273 = arith.subf %263, %272 : vector<16x32xf32>
    %274 = vector.broadcast %271 : vector<16x1xf32> to vector<16x32xf32>
    %275 = arith.subf %263, %274 : vector<16x32xf32>
    %276 = arith.mulf %273, %275 : vector<16x32xf32>
    %cst_97 = arith.constant dense<0.000000e+00> : vector<16xf32>
    %277 = vector.multi_reduction <add>, %276, %cst_97 [1] : vector<16x32xf32> to vector<16xf32>
    %278 = vector.shape_cast %277 : vector<16xf32> to vector<16x1xf32>
    %cst_98 = arith.constant 3.200000e+01 : f32
    %279 = vector.broadcast %cst_98 : f32 to vector<16x1xf32>
    %280 = arith.divf %278, %279 : vector<16x1xf32>
    %281 = vector.broadcast %271 : vector<16x1xf32> to vector<16x32xf32>
    %282 = arith.subf %263, %281 : vector<16x32xf32>
    %cst_99 = arith.constant 9.99999996E-13 : f32
    %283 = vector.broadcast %cst_99 : f32 to vector<16x1xf32>
    %284 = arith.addf %280, %283 : vector<16x1xf32>
    %285 = math.rsqrt %284 : vector<16x1xf32>
    %286 = vector.broadcast %285 : vector<16x1xf32> to vector<16x32xf32>
    %287 = arith.mulf %282, %286 : vector<16x32xf32>
    %288 = vector.broadcast %265 : vector<1x32xf32> to vector<16x32xf32>
    %289 = arith.mulf %287, %288 : vector<16x32xf32>
    %290 = vector.broadcast %267 : vector<1x32xf32> to vector<16x32xf32>
    %291 = arith.addf %289, %290 : vector<16x32xf32>
    %292 = arith.truncf %291 : vector<16x32xf32> to vector<16x32xbf16>
    %c1_100 = arith.constant 1 : index
    %c0_101 = arith.constant 0 : index
    %c0_102 = arith.constant 0 : index
    %293 = vector.load %arg10[%c1_100, %c0_101, %c0_102] : memref<2x32x64xbf16, #tpu.memory_space<vmem>>, vector<1x32x64xbf16>
    %294 = vector.shape_cast %293 : vector<1x32x64xbf16> to vector<32x64xbf16>
    %cst_103 = arith.constant dense<0.000000e+00> : vector<16x64xf32>
    %295 = tpu.matmul %292, %294, %cst_103 {dimension_numbers = #tpu.dot_dimension_numbers<[1], [0], [0], [1], [0, 0, 1, 1], [], []>} : vector<16x32xbf16>, vector<32x64xbf16>, vector<16x64xf32> -> vector<16x64xf32>
    %c1_104 = arith.constant 1 : index
    %c0_105 = arith.constant 0 : index
    %c0_106 = arith.constant 0 : index
    %296 = vector.load %arg11[%c1_104, %c0_105, %c0_106] : memref<2x1x64xf32, #tpu.memory_space<vmem>>, vector<1x1x64xf32>
    %297 = vector.shape_cast %296 : vector<1x1x64xf32> to vector<1x64xf32>
    %298 = vector.broadcast %297 : vector<1x64xf32> to vector<16x64xf32>
    %299 = arith.addf %295, %298 : vector<16x64xf32>
    %cst_107 = arith.constant 5.000000e-01 : f32
    %300 = vector.broadcast %cst_107 : f32 to vector<16x64xf32>
    %301 = arith.mulf %300, %299 : vector<16x64xf32>
    %cst_108 = arith.constant 4.471500e-02 : f32
    %302 = vector.broadcast %cst_108 : f32 to vector<16x64xf32>
    %303 = arith.mulf %302, %299 : vector<16x64xf32>
    %304 = arith.mulf %303, %299 : vector<16x64xf32>
    %305 = arith.mulf %304, %299 : vector<16x64xf32>
    %306 = arith.addf %299, %305 : vector<16x64xf32>
    %cst_109 = arith.constant 0.797884583 : f32
    %307 = vector.broadcast %cst_109 : f32 to vector<16x64xf32>
    %308 = arith.mulf %307, %306 : vector<16x64xf32>
    %309 = math.tanh %308 : vector<16x64xf32>
    %cst_110 = arith.constant 1.000000e+00 : f32
    %310 = vector.broadcast %cst_110 : f32 to vector<16x64xf32>
    %311 = arith.addf %310, %309 : vector<16x64xf32>
    %312 = arith.mulf %301, %311 : vector<16x64xf32>
    %313 = arith.truncf %312 : vector<16x64xf32> to vector<16x64xbf16>
    %c1_111 = arith.constant 1 : index
    %c0_112 = arith.constant 0 : index
    %c0_113 = arith.constant 0 : index
    %314 = vector.load %arg12[%c1_111, %c0_112, %c0_113] : memref<2x64x32xbf16, #tpu.memory_space<vmem>>, vector<1x64x32xbf16>
    %315 = vector.shape_cast %314 : vector<1x64x32xbf16> to vector<64x32xbf16>
    %cst_114 = arith.constant dense<0.000000e+00> : vector<16x32xf32>
    %316 = tpu.matmul %313, %315, %cst_114 {dimension_numbers = #tpu.dot_dimension_numbers<[1], [0], [0], [1], [0, 0, 1, 1], [], []>} : vector<16x64xbf16>, vector<64x32xbf16>, vector<16x32xf32> -> vector<16x32xf32>
    %c1_115 = arith.constant 1 : index
    %c0_116 = arith.constant 0 : index
    %c0_117 = arith.constant 0 : index
    %317 = vector.load %arg13[%c1_115, %c0_116, %c0_117] : memref<2x1x32xf32, #tpu.memory_space<vmem>>, vector<1x1x32xf32>
    %318 = vector.shape_cast %317 : vector<1x1x32xf32> to vector<1x32xf32>
    %319 = vector.broadcast %318 : vector<1x32xf32> to vector<16x32xf32>
    %320 = arith.addf %316, %319 : vector<16x32xf32>
    %321 = arith.addf %320, %291 : vector<16x32xf32>
    %c1_118 = arith.constant 1 : index
    %c0_119 = arith.constant 0 : index
    %c0_120 = arith.constant 0 : index
    %322 = vector.load %arg14[%c1_118, %c0_119, %c0_120] : memref<2x1x32xf32, #tpu.memory_space<vmem>>, vector<1x1x32xf32>
    %323 = vector.shape_cast %322 : vector<1x1x32xf32> to vector<1x32xf32>
    %c1_121 = arith.constant 1 : index
    %c0_122 = arith.constant 0 : index
    %c0_123 = arith.constant 0 : index
    %324 = vector.load %arg15[%c1_121, %c0_122, %c0_123] : memref<2x1x32xf32, #tpu.memory_space<vmem>>, vector<1x1x32xf32>
    %325 = vector.shape_cast %324 : vector<1x1x32xf32> to vector<1x32xf32>
    %cst_124 = arith.constant dense<0.000000e+00> : vector<16xf32>
    %326 = vector.multi_reduction <add>, %321, %cst_124 [1] : vector<16x32xf32> to vector<16xf32>
    %327 = vector.shape_cast %326 : vector<16xf32> to vector<16x1xf32>
    %cst_125 = arith.constant 3.200000e+01 : f32
    %328 = vector.broadcast %cst_125 : f32 to vector<16x1xf32>
    %329 = arith.divf %327, %328 : vector<16x1xf32>
    %330 = vector.broadcast %329 : vector<16x1xf32> to vector<16x32xf32>
    %331 = arith.subf %321, %330 : vector<16x32xf32>
    %332 = vector.broadcast %329 : vector<16x1xf32> to vector<16x32xf32>
    %333 = arith.subf %321, %332 : vector<16x32xf32>
    %334 = arith.mulf %331, %333 : vector<16x32xf32>
    %cst_126 = arith.constant dense<0.000000e+00> : vector<16xf32>
    %335 = vector.multi_reduction <add>, %334, %cst_126 [1] : vector<16x32xf32> to vector<16xf32>
    %336 = vector.shape_cast %335 : vector<16xf32> to vector<16x1xf32>
    %cst_127 = arith.constant 3.200000e+01 : f32
    %337 = vector.broadcast %cst_127 : f32 to vector<16x1xf32>
    %338 = arith.divf %336, %337 : vector<16x1xf32>
    %339 = vector.broadcast %329 : vector<16x1xf32> to vector<16x32xf32>
    %340 = arith.subf %321, %339 : vector<16x32xf32>
    %cst_128 = arith.constant 9.99999996E-13 : f32
    %341 = vector.broadcast %cst_128 : f32 to vector<16x1xf32>
    %342 = arith.addf %338, %341 : vector<16x1xf32>
    %343 = math.rsqrt %342 : vector<16x1xf32>
    %344 = vector.broadcast %343 : vector<16x1xf32> to vector<16x32xf32>
    %345 = arith.mulf %340, %344 : vector<16x32xf32>
    %346 = vector.broadcast %323 : vector<1x32xf32> to vector<16x32xf32>
    %347 = arith.mulf %345, %346 : vector<16x32xf32>
    %348 = vector.broadcast %325 : vector<1x32xf32> to vector<16x32xf32>
    %349 = arith.addf %347, %348 : vector<16x32xf32>
    %350 = vector.extract_strided_slice %349 {offsets = [0, 0], sizes = [1, 32], strides = [1, 1]} : vector<16x32xf32> to vector<1x32xf32>
    %351 = vector.extract_strided_slice %349 {offsets = [8, 0], sizes = [1, 32], strides = [1, 1]} : vector<16x32xf32> to vector<1x32xf32>
    %352 = tpu.concatenate %350, %351 in 0 : vector<1x32xf32>, vector<1x32xf32> -> vector<2x32xf32>
    %353 = arith.truncf %352 : vector<2x32xf32> to vector<2x32xbf16>
    %c0_129 = arith.constant 0 : index
    %c0_130 = arith.constant 0 : index
    %354 = vector.load %arg16[%c0_129, %c0_130] : memref<32x32xbf16, #tpu.memory_space<vmem>>, vector<32x32xbf16>
    %cst_131 = arith.constant dense<0.000000e+00> : vector<2x32xf32>
    %355 = tpu.matmul %353, %354, %cst_131 {dimension_numbers = #tpu.dot_dimension_numbers<[1], [0], [0], [1], [0, 0, 1, 1], [], []>} : vector<2x32xbf16>, vector<32x32xbf16>, vector<2x32xf32> -> vector<2x32xf32>
    %c0_132 = arith.constant 0 : index
    %c0_133 = arith.constant 0 : index
    %356 = vector.load %arg17[%c0_132, %c0_133] : memref<1x32xf32, #tpu.memory_space<vmem>>, vector<1x32xf32>
    %357 = vector.broadcast %356 : vector<1x32xf32> to vector<2x32xf32>
    %358 = arith.addf %355, %357 : vector<2x32xf32>
    %359 = math.tanh %358 : vector<2x32xf32>
    %c0_134 = arith.constant 0 : index
    %c0_135 = arith.constant 0 : index
    %360 = vector.load %arg18[%c0_134, %c0_135] : memref<2x32xf32, #tpu.memory_space<vmem>>, vector<2x32xf32>
    tpu.vector_store %arg18[%c0_134, %c0_135], %359 {strides = array<i32>} : memref<2x32xf32, #tpu.memory_space<vmem>>, vector<2x32xf32>,
    return
  }
}

</mosaic_0001>

<llo_original>
// kernel: bert_forward.1
$region0: #{bert_forward.1}
  #allocation0 [shape = 'u32[]', space=smem, size = 0x4, offset = 0x4, fixed_abs, tag = 'smem constant byte address 0x4 - core index']
  #allocation1 [shape = 'u32[144,128]{1,0:T(1,128)}', space=vmem, size = 0x12000, scoped, tag = 'internal scratch']
  %s0 = inlined_call_operand.vmem [shape: f32[16,32], index: 0, kind: input, shape index: {}]
  %s1 = inlined_call_operand.vmem [shape: f32[4,1,8], index: 1, kind: input, shape index: {}]
  %s2 = inlined_call_operand.vmem [shape: f32[1,32], index: 2, kind: input, shape index: {}]
  %s3 = inlined_call_operand.vmem [shape: f32[1,32], index: 3, kind: input, shape index: {}]
  %s4 = inlined_call_operand.vmem [shape: bf16[2,32,96], index: 4, kind: input, shape index: {}]
  %s5 = inlined_call_operand.vmem [shape: f32[2,1,96], index: 5, kind: input, shape index: {}]
  %s6 = inlined_call_operand.vmem [shape: bf16[2,32,32], index: 6, kind: input, shape index: {}]
  %s7 = inlined_call_operand.vmem [shape: f32[2,1,32], index: 7, kind: input, shape index: {}]
  %s8 = inlined_call_operand.vmem [shape: f32[2,1,32], index: 8, kind: input, shape index: {}]
  %s9 = inlined_call_operand.vmem [shape: f32[2,1,32], index: 9, kind: input, shape index: {}]
  %s10 = inlined_call_operand.vmem [shape: bf16[2,32,64], index: 10, kind: input, shape index: {}]
  %s11 = inlined_call_operand.vmem [shape: f32[2,1,64], index: 11, kind: input, shape index: {}]
  %s12 = inlined_call_operand.vmem [shape: bf16[2,64,32], index: 12, kind: input, shape index: {}]
  %s13 = inlined_call_operand.vmem [shape: f32[2,1,32], index: 13, kind: input, shape index: {}]
  %s14 = inlined_call_operand.vmem [shape: f32[2,1,32], index: 14, kind: input, shape index: {}]
  %s15 = inlined_call_operand.vmem [shape: f32[2,1,32], index: 15, kind: input, shape index: {}]
  %s16 = inlined_call_operand.vmem [shape: bf16[32,32], index: 16, kind: input, shape index: {}]
  %s17 = inlined_call_operand.vmem [shape: f32[1,32], index: 17, kind: input, shape index: {}]
  %s18 = inlined_call_operand.hbm [shape: f32[2,32], index: 18, kind: output, shape index: {}]
  %s19 = sld [smem:[#allocation0]]
  $region82: #{bert_forward.1} parent=0
    _
  %s21 = ssub.s32 1, %s19
  %s22 = scalar_select 0, %s21, %s19
  $region1: #{bert_forward.1} parent=0
    #allocation2 [shape = 'u8[1024]{0}', space=vmem, size = 0x400, scoped, tag = 'output window, operand 0, single buffered']
    #allocation3 [shape = 's32[1]{0}', space=sflag, size = 0x4, scoped, tag = 'scoped memory for bert_forward.1']
    %23 = vsyncpa [#allocation3], 0
    // Predicated region
    $region2: #{bert_forward.1} parent=1 // pred_check
      _
    $region3: #{bert_forward.1} parent=1 // pred_check_branch
      %25 = sbr.rel (0) target = $region5
    $region4: #{bert_forward.1} parent=1 // pred_region
      _
    $region5: #{bert_forward.1} parent=1 // pred_fallthru
      _
    // Predicated region
    $region6: #{bert_forward.1} parent=1 // pred_check
      _
    $region7: #{bert_forward.1} parent=1 // pred_check_branch
      %27 = sbr.rel (0) target = $region9
    $region8: #{bert_forward.1} parent=1 // pred_region
      _
    $region9: #{bert_forward.1} parent=1 // pred_fallthru
      _
    // Predicated region
    $region10: #{bert_forward.1} parent=1 // pred_check
      _
    $region11: #{bert_forward.1} parent=1 // pred_check_branch
      %29 = sbr.rel (0) target = $region13
    $region12: #{bert_forward.1} parent=1 // pred_region
      _
    $region13: #{bert_forward.1} parent=1 // pred_fallthru
      _
    // Predicated region
    $region14: #{bert_forward.1} parent=1 // pred_check
      _
    $region15: #{bert_forward.1} parent=1 // pred_check_branch
      %31 = sbr.rel (0) target = $region17
    $region16: #{bert_forward.1} parent=1 // pred_region
      _
    $region17: #{bert_forward.1} parent=1 // pred_fallthru
      _
    // Predicated region
    $region18: #{bert_forward.1} parent=1 // pred_check
      _
    $region19: #{bert_forward.1} parent=1 // pred_check_branch
      %33 = sbr.rel (0) target = $region21
    $region20: #{bert_forward.1} parent=1 // pred_region
      _
    $region21: #{bert_forward.1} parent=1 // pred_fallthru
      _
    // Predicated region
    $region22: #{bert_forward.1} parent=1 // pred_check
      _
    $region23: #{bert_forward.1} parent=1 // pred_check_branch
      %35 = sbr.rel (0) target = $region25
    $region24: #{bert_forward.1} parent=1 // pred_region
      _
    $region25: #{bert_forward.1} parent=1 // pred_fallthru
      _
    // Predicated region
    $region26: #{bert_forward.1} parent=1 // pred_check
      _
    $region27: #{bert_forward.1} parent=1 // pred_check_branch
      %37 = sbr.rel (0) target = $region29
    $region28: #{bert_forward.1} parent=1 // pred_region
      _
    $region29: #{bert_forward.1} parent=1 // pred_fallthru
      _
    // Predicated region
    $region30: #{bert_forward.1} parent=1 // pred_check
      _
    $region31: #{bert_forward.1} parent=1 // pred_check_branch
      %39 = sbr.rel (0) target = $region33
    $region32: #{bert_forward.1} parent=1 // pred_region
      _
    $region33: #{bert_forward.1} parent=1 // pred_fallthru
      _
    // Predicated region
    $region34: #{bert_forward.1} parent=1 // pred_check
      _
    $region35: #{bert_forward.1} parent=1 // pred_check_branch
      %41 = sbr.rel (0) target = $region37
    $region36: #{bert_forward.1} parent=1 // pred_region
      _
    $region37: #{bert_forward.1} parent=1 // pred_fallthru
      _
    // Predicated region
    $region38: #{bert_forward.1} parent=1 // pred_check
      _
    $region39: #{bert_forward.1} parent=1 // pred_check_branch
      %43 = sbr.rel (0) target = $region41
    $region40: #{bert_forward.1} parent=1 // pred_region
      _
    $region41: #{bert_forward.1} parent=1 // pred_fallthru
      _
    // Predicated region
    $region42: #{bert_forward.1} parent=1 // pred_check
      _
    $region43: #{bert_forward.1} parent=1 // pred_check_branch
      %45 = sbr.rel (0) target = $region45
    $region44: #{bert_forward.1} parent=1 // pred_region
      _
    $region45: #{bert_forward.1} parent=1 // pred_fallthru
      _
    // Predicated region
    $region46: #{bert_forward.1} parent=1 // pred_check
      _
    $region47: #{bert_forward.1} parent=1 // pred_check_branch
      %47 = sbr.rel (0) target = $region49
    $region48: #{bert_forward.1} parent=1 // pred_region
      _
    $region49: #{bert_forward.1} parent=1 // pred_fallthru
      _
    // Predicated region
    $region50: #{bert_forward.1} parent=1 // pred_check
      _
    $region51: #{bert_forward.1} parent=1 // pred_check_branch
      %49 = sbr.rel (0) target = $region53
    $region52: #{bert_forward.1} parent=1 // pred_region
      _
    $region53: #{bert_forward.1} parent=1 // pred_fallthru
      _
    // Predicated region
    $region54: #{bert_forward.1} parent=1 // pred_check
      _
    $region55: #{bert_forward.1} parent=1 // pred_check_branch
      %51 = sbr.rel (0) target = $region57
    $region56: #{bert_forward.1} parent=1 // pred_region
      _
    $region57: #{bert_forward.1} parent=1 // pred_fallthru
      _
    // Predicated region
    $region58: #{bert_forward.1} parent=1 // pred_check
      _
    $region59: #{bert_forward.1} parent=1 // pred_check_branch
      %53 = sbr.rel (0) target = $region61
    $region60: #{bert_forward.1} parent=1 // pred_region
      _
    $region61: #{bert_forward.1} parent=1 // pred_fallthru
      _
    // Predicated region
    $region62: #{bert_forward.1} parent=1 // pred_check
      _
    $region63: #{bert_forward.1} parent=1 // pred_check_branch
      %55 = sbr.rel (0) target = $region65
    $region64: #{bert_forward.1} parent=1 // pred_region
      _
    $region65: #{bert_forward.1} parent=1 // pred_fallthru
      _
    // Predicated region
    $region66: #{bert_forward.1} parent=1 // pred_check
      _
    $region67: #{bert_forward.1} parent=1 // pred_check_branch
      %57 = sbr.rel (0) target = $region69
    $region68: #{bert_forward.1} parent=1 // pred_region
      _
    $region69: #{bert_forward.1} parent=1 // pred_fallthru
      _
    // Predicated region
    $region70: #{bert_forward.1} parent=1 // pred_check
      _
    $region71: #{bert_forward.1} parent=1 // pred_check_branch
      %59 = sbr.rel (0) target = $region73
    $region72: #{bert_forward.1} parent=1 // pred_region
      _
    $region73: #{bert_forward.1} parent=1 // pred_fallthru
      _
    %v61 = vld [vmem:[%s0] sm:$0xff]
    %v62 = vld [vmem:[%s0 + $0x8] sm:$0xff]
    %v63 = vld [vmem:[%s2] sm:$0x1]
    %v64 = vld [vmem:[%s3] sm:$0x1]
    %vm65 = vcmask 261120
    %v66 = vsel %vm65, %v61, 0.0
    %67 = vadd.xlane.f32.xlu0 %v66
    %v68 = vpop.xlane.xlu0 %67
    %v69 = vsel %vm65, %v62, 0.0
    %70 = vadd.xlane.f32.xlu0 %v69
    %v71 = vpop.xlane.xlu0 %70
    %v72 = vrcp.pop 32.0
    %v73 = vmul.f32 %v68, %v72
    %v74 = vmul.f32 %v71, %v72
    %v75 = vsub.f32 %v61, %v73
    %v76 = vsub.f32 %v62, %v74
    %v77 = vmul.f32 %v75, %v75
    %v78 = vmul.f32 %v76, %v76
    %v79 = vsel %vm65, %v77, 0.0
    %80 = vadd.xlane.f32.xlu0 %v79
    %v81 = vpop.xlane.xlu0 %80
    %v82 = vsel %vm65, %v78, 0.0
    %83 = vadd.xlane.f32.xlu0 %v82
    %v84 = vpop.xlane.xlu0 %83
    %v85 = vmul.f32 %v81, %v72
    %v86 = vmul.f32 %v84, %v72
    %v87 = vadd.f32 %v85, 1e-12
    %v88 = vadd.f32 %v86, 1e-12
    %v89 = vrsqrt.pop %v87
    %v90 = vrsqrt.pop %v88
    %v91 = vmul.f32 %v75, %v89
    %v92 = vmul.f32 %v76, %v90
    %v94 = vlaneseq
    %v95 = vshrl.u32 %v94, 7
    %v96 = vsub.s32 0, %v95
    %v97 = vrot.slane %v63, %v96
    %v99 = vmul.f32 %v91, %v97
    %v100 = vmul.f32 %v92, %v97
    %v102 = vlaneseq
    %v103 = vshrl.u32 %v102, 7
    %v104 = vsub.s32 0, %v103
    %v105 = vrot.slane %v64, %v104
    %v107 = vadd.f32 %v99, %v105
    %v108 = vadd.f32 %v100, %v105
    %v109 = vld [vmem:[%s1] sm:$0x1]
    %v110 = vld [vmem:[%s1 + $0x1] sm:$0x1]
    %v111 = vld [vmem:[%s1 + $0x2] sm:$0x1]
    %v112 = vld [vmem:[%s1 + $0x3] sm:$0x1]
    %v113 = vpack.c.bf16 %v108, %v107
    %v114 = vld [vmem:[%s4] sm:$0xf]
    %v115 = vld [vmem:[%s4 + $0x4] sm:$0xf]
    %v116 = vld [vmem:[%s4 + $0x8] sm:$0xf]
    %v117 = vld [vmem:[%s4 + $0xc] sm:$0xf]
    %v118 = vld [vmem:[%s5] sm:$0x1]
    %v120 = vlaneseq
    %v121 = vshrl.u32 %v120, 7
    %v122 = vsub.s32 0, %v121
    %v123 = vrot.slane %v118, %v122
    %v129 = vunpack.c.l.b16 %v114
    %v130 = vunpack.c.l.b16 %v115
    %v131 = vunpack.c.l.b16 %v116
    %v132 = vunpack.c.l.b16 %v117
    %v133 = vpack.c.b16 %v130, %v129
    %v134 = vpack.c.b16 %v132, %v131
    %v138 = vsel %vm65, %v113, 0
    %140 = vmatprep.subr.bf16.mxu0 0
    %141 = vmatpush1.bf16.msra.mxu0 %v133
    %142 = vmatprep.subr.bf16.mxu0 0
    %143 = vmatpush1.bf16.msra.mxu0 %v134
    %144 = vmatprep.subr.bf16.mxu0 0
    %145 = vmatpush1.bf16.msra.mxu0 0
    %146 = vmatprep.subr.bf16.mxu0 0
    %147 = vmatpush1.bf16.msra.mxu0 0
    %148 = vmatprep.subr.bf16.mxu0 0
    %149 = vmatpush1.bf16.msra.mxu0 0
    %150 = vmatprep.subr.bf16.mxu0 0
    %151 = vmatpush1.bf16.msra.mxu0 0
    %152 = vmatprep.subr.bf16.mxu0 0
    %153 = vmatpush1.bf16.msra.mxu0 0
    %154 = vmatprep.subr.bf16.mxu0 0
    %155 = vmatpush1.bf16.msra.mxu0 0
    %156 = vmatprep.subr.bf16.mxu0 0
    %157 = vmatpush1.bf16.msra.mxu0 0
    %158 = vmatprep.subr.bf16.mxu0 0
    %159 = vmatpush1.bf16.msra.mxu0 0
    %160 = vmatprep.subr.bf16.mxu0 0
    %161 = vmatpush1.bf16.msra.mxu0 0
    %162 = vmatprep.subr.bf16.mxu0 0
    %163 = vmatpush1.bf16.msra.mxu0 0
    %164 = vmatprep.subr.bf16.mxu0 0
    %165 = vmatpush1.bf16.msra.mxu0 0
    %166 = vmatprep.subr.bf16.mxu0 0
    %167 = vmatpush1.bf16.msra.mxu0 0
    %168 = vmatprep.subr.bf16.mxu0 0
    %169 = vmatpush1.bf16.msra.mxu0 0
    %170 = vmatprep.subr.bf16.mxu0 0
    %171 = vmatpush1.bf16.msra.mxu0 0
    %172 = vmatprep.mubr.bf16.mxu0 0
    %173 = vmatmul.mubr.bf16.gmra.mrb[0].mxu0 %v138
    %v174 = vpop.f32.mrb[0].mxu0
    %v175 = vadd.f32 %v123, %v174
    %v176 = vpop.f32.mrb[0].mxu0
    %v177 = vpop.f32.mrb[0].mxu0
    %v178 = vadd.f32 %v123, %v177
    %v179 = vpop.f32.mrb[0].mxu0
    %180 = vdwg.mxu0
    %182 = vrot.lane.b32.xlu0 %v175, 112
    %v183 = vpop.permute.xlu0 %182
    %186 = vrot.lane.b32.xlu0 %v178, 112
    %v187 = vpop.permute.xlu0 %186
    %v189 = vpack.c.bf16 %v175, %v175
    %v190 = vpack.c.bf16 %v183, %v183
    %v191 = vpack.c.bf16 %v178, %v178
    %v192 = vpack.c.bf16 %v187, %v187
    %194 = vrot.lane.b32.xlu0 %v189, 96
    %v195 = vpop.permute.xlu0 %194
    %vm196 = vcmask 130048
    %v198 = vsel %vm196, %v189, 0
    %v201 = vsel %vm196, %v195, 0
    %203 = vmatprep.subr.bf16.mxu0 0
    %204 = vmatpush1.bf16.xpose.msra.mxu0 %v201
    %205 = vmatprep.subr.bf16.mxu0 0
    %206 = vmatpush1.bf16.xpose.msra.mxu0 0
    %207 = vmatprep.subr.bf16.mxu0 0
    %208 = vmatpush1.bf16.xpose.msra.mxu0 0
    %209 = vmatprep.subr.bf16.mxu0 0
    %210 = vmatpush1.bf16.xpose.msra.mxu0 0
    %211 = vmatprep.subr.bf16.mxu0 0
    %212 = vmatpush1.bf16.xpose.msra.mxu0 0
    %213 = vmatprep.subr.bf16.mxu0 0
    %214 = vmatpush1.bf16.xpose.msra.mxu0 0
    %215 = vmatprep.subr.bf16.mxu0 0
    %216 = vmatpush1.bf16.xpose.msra.mxu0 0
    %217 = vmatprep.subr.bf16.mxu0 0
    %218 = vmatpush1.bf16.xpose.msra.mxu0 0
    %219 = vmatprep.subr.bf16.mxu0 0
    %220 = vmatpush1.bf16.xpose.msra.mxu0 0
    %221 = vmatprep.subr.bf16.mxu0 0
    %222 = vmatpush1.bf16.xpose.msra.mxu0 0
    %223 = vmatprep.subr.bf16.mxu0 0
    %224 = vmatpush1.bf16.xpose.msra.mxu0 0
    %225 = vmatprep.subr.bf16.mxu0 0
    %226 = vmatpush1.bf16.xpose.msra.mxu0 0
    %227 = vmatprep.subr.bf16.mxu0 0
    %228 = vmatpush1.bf16.xpose.msra.mxu0 0
    %229 = vmatprep.subr.bf16.mxu0 0
    %230 = vmatpush1.bf16.xpose.msra.mxu0 0
    %231 = vmatprep.subr.bf16.mxu0 0
    %232 = vmatpush1.bf16.xpose.msra.mxu0 0
    %233 = vmatprep.subr.bf16.mxu0 0
    %234 = vmatpush1.bf16.xpose.msra.mxu0 0
    %235 = vmatprep.mubr.bf16.mxu0 0
    %236 = vmatmul.mubr.bf16.gmra.mrb[0].mxu0 %v198
    %v237 = vpop.f32.mrb[0].mxu0
    %v238 = vadd.f32 0.0, %v237
    %v239 = vpop.f32.mrb[0].mxu0
    %v240 = vpop.f32.mrb[0].mxu0
    %v241 = vpop.f32.mrb[0].mxu0
    %242 = vdwg.mxu0
    %244 = vrot.lane.b32.xlu0 %v190, 96
    %v245 = vpop.permute.xlu0 %244
    %v247 = vsel %vm196, %v190, 0
    %v250 = vsel %vm196, %v245, 0
    %252 = vmatprep.subr.bf16.mxu0 0
    %253 = vmatpush1.bf16.xpose.msra.mxu0 %v250
    %254 = vmatprep.subr.bf16.mxu0 0
    %255 = vmatpush1.bf16.xpose.msra.mxu0 0
    %256 = vmatprep.subr.bf16.mxu0 0
    %257 = vmatpush1.bf16.xpose.msra.mxu0 0
    %258 = vmatprep.subr.bf16.mxu0 0
    %259 = vmatpush1.bf16.xpose.msra.mxu0 0
    %260 = vmatprep.subr.bf16.mxu0 0
    %261 = vmatpush1.bf16.xpose.msra.mxu0 0
    %262 = vmatprep.subr.bf16.mxu0 0
    %263 = vmatpush1.bf16.xpose.msra.mxu0 0
    %264 = vmatprep.subr.bf16.mxu0 0
    %265 = vmatpush1.bf16.xpose.msra.mxu0 0
    %266 = vmatprep.subr.bf16.mxu0 0
    %267 = vmatpush1.bf16.xpose.msra.mxu0 0
    %268 = vmatprep.subr.bf16.mxu0 0
    %269 = vmatpush1.bf16.xpose.msra.mxu0 0
    %270 = vmatprep.subr.bf16.mxu0 0
    %271 = vmatpush1.bf16.xpose.msra.mxu0 0
    %272 = vmatprep.subr.bf16.mxu0 0
    %273 = vmatpush1.bf16.xpose.msra.mxu0 0
    %274 = vmatprep.subr.bf16.mxu0 0
    %275 = vmatpush1.bf16.xpose.msra.mxu0 0
    %276 = vmatprep.subr.bf16.mxu0 0
    %277 = vmatpush1.bf16.xpose.msra.mxu0 0
    %278 = vmatprep.subr.bf16.mxu0 0
    %279 = vmatpush1.bf16.xpose.msra.mxu0 0
    %280 = vmatprep.subr.bf16.mxu0 0
    %281 = vmatpush1.bf16.xpose.msra.mxu0 0
    %282 = vmatprep.subr.bf16.mxu0 0
    %283 = vmatpush1.bf16.xpose.msra.mxu0 0
    %284 = vmatprep.mubr.bf16.mxu0 0
    %285 = vmatmul.mubr.bf16.gmra.mrb[0].mxu0 %v247
    %v286 = vpop.f32.mrb[0].mxu0
    %v287 = vadd.f32 0.0, %v286
    %v288 = vpop.f32.mrb[0].mxu0
    %v289 = vpop.f32.mrb[0].mxu0
    %v290 = vpop.f32.mrb[0].mxu0
    %291 = vdwg.mxu0
    %293 = vrot.lane.b32.xlu0 %v191, 96
    %v294 = vpop.permute.xlu0 %293
    %v296 = vsel %vm196, %v191, 0
    %v299 = vsel %vm196, %v294, 0
    %301 = vmatprep.subr.bf16.mxu0 0
    %302 = vmatpush1.bf16.xpose.msra.mxu0 %v299
    %303 = vmatprep.subr.bf16.mxu0 0
    %304 = vmatpush1.bf16.xpose.msra.mxu0 0
    %305 = vmatprep.subr.bf16.mxu0 0
    %306 = vmatpush1.bf16.xpose.msra.mxu0 0
    %307 = vmatprep.subr.bf16.mxu0 0
    %308 = vmatpush1.bf16.xpose.msra.mxu0 0
    %309 = vmatprep.subr.bf16.mxu0 0
    %310 = vmatpush1.bf16.xpose.msra.mxu0 0
    %311 = vmatprep.subr.bf16.mxu0 0
    %312 = vmatpush1.bf16.xpose.msra.mxu0 0
    %313 = vmatprep.subr.bf16.mxu0 0
    %314 = vmatpush1.bf16.xpose.msra.mxu0 0
    %315 = vmatprep.subr.bf16.mxu0 0
    %316 = vmatpush1.bf16.xpose.msra.mxu0 0
    %317 = vmatprep.subr.bf16.mxu0 0
    %318 = vmatpush1.bf16.xpose.msra.mxu0 0
    %319 = vmatprep.subr.bf16.mxu0 0
    %320 = vmatpush1.bf16.xpose.msra.mxu0 0
    %321 = vmatprep.subr.bf16.mxu0 0
    %322 = vmatpush1.bf16.xpose.msra.mxu0 0
    %323 = vmatprep.subr.bf16.mxu0 0
    %324 = vmatpush1.bf16.xpose.msra.mxu0 0
    %325 = vmatprep.subr.bf16.mxu0 0
    %326 = vmatpush1.bf16.xpose.msra.mxu0 0
    %327 = vmatprep.subr.bf16.mxu0 0
    %328 = vmatpush1.bf16.xpose.msra.mxu0 0
    %329 = vmatprep.subr.bf16.mxu0 0
    %330 = vmatpush1.bf16.xpose.msra.mxu0 0
    %331 = vmatprep.subr.bf16.mxu0 0
    %332 = vmatpush1.bf16.xpose.msra.mxu0 0
    %333 = vmatprep.mubr.bf16.mxu0 0
    %334 = vmatmul.mubr.bf16.gmra.mrb[0].mxu0 %v296
    %v335 = vpop.f32.mrb[0].mxu0
    %v336 = vadd.f32 0.0, %v335
    %v337 = vpop.f32.mrb[0].mxu0
    %v338 = vpop.f32.mrb[0].mxu0
    %v339 = vpop.f32.mrb[0].mxu0
    %340 = vdwg.mxu0
    %342 = vrot.lane.b32.xlu0 %v192, 96
    %v343 = vpop.permute.xlu0 %342
    %v345 = vsel %vm196, %v192, 0
    %v348 = vsel %vm196, %v343, 0
    %350 = vmatprep.subr.bf16.mxu0 0
    %351 = vmatpush1.bf16.xpose.msra.mxu0 %v348
    %352 = vmatprep.subr.bf16.mxu0 0
    %353 = vmatpush1.bf16.xpose.msra.mxu0 0
    %354 = vmatprep.subr.bf16.mxu0 0
    %355 = vmatpush1.bf16.xpose.msra.mxu0 0
    %356 = vmatprep.subr.bf16.mxu0 0
    %357 = vmatpush1.bf16.xpose.msra.mxu0 0
    %358 = vmatprep.subr.bf16.mxu0 0
    %359 = vmatpush1.bf16.xpose.msra.mxu0 0
    %360 = vmatprep.subr.bf16.mxu0 0
    %361 = vmatpush1.bf16.xpose.msra.mxu0 0
    %362 = vmatprep.subr.bf16.mxu0 0
    %363 = vmatpush1.bf16.xpose.msra.mxu0 0
    %364 = vmatprep.subr.bf16.mxu0 0
    %365 = vmatpush1.bf16.xpose.msra.mxu0 0
    %366 = vmatprep.subr.bf16.mxu0 0
    %367 = vmatpush1.bf16.xpose.msra.mxu0 0
    %368 = vmatprep.subr.bf16.mxu0 0
    %369 = vmatpush1.bf16.xpose.msra.mxu0 0
    %370 = vmatprep.subr.bf16.mxu0 0
    %371 = vmatpush1.bf16.xpose.msra.mxu0 0
    %372 = vmatprep.subr.bf16.mxu0 0
    %373 = vmatpush1.bf16.xpose.msra.mxu0 0
    %374 = vmatprep.subr.bf16.mxu0 0
    %375 = vmatpush1.bf16.xpose.msra.mxu0 0
    %376 = vmatprep.subr.bf16.mxu0 0
    %377 = vmatpush1.bf16.xpose.msra.mxu0 0
    %378 = vmatprep.subr.bf16.mxu0 0
    %379 = vmatpush1.bf16.xpose.msra.mxu0 0
    %380 = vmatprep.subr.bf16.mxu0 0
    %381 = vmatpush1.bf16.xpose.msra.mxu0 0
    %382 = vmatprep.mubr.bf16.mxu0 0
    %383 = vmatmul.mubr.bf16.gmra.mrb[0].mxu0 %v345
    %v384 = vpop.f32.mrb[0].mxu0
    %v385 = vadd.f32 0.0, %v384
    %v386 = vpop.f32.mrb[0].mxu0
    %v387 = vpop.f32.mrb[0].mxu0
    %v388 = vpop.f32.mrb[0].mxu0
    %389 = vdwg.mxu0
    %v390 = vmul.f32 %v238, 0.25
    %v391 = vmul.f32 %v287, 0.25
    %v392 = vmul.f32 %v336, 0.25
    %v393 = vmul.f32 %v385, 0.25
    %v398 = vlaneseq
    %v399 = vshrl.u32 %v398, 7
    %v400 = vsub.s32 0, %v399
    %v401 = vrot.slane %v109, %v400
    %v402 = vlaneseq
    %v403 = vshrl.u32 %v402, 7
    %v404 = vsub.s32 0, %v403
    %v405 = vrot.slane %v110, %v404
    %v406 = vlaneseq
    %v407 = vshrl.u32 %v406, 7
    %v408 = vsub.s32 0, %v407
    %v409 = vrot.slane %v111, %v408
    %v410 = vlaneseq
    %v411 = vshrl.u32 %v410, 7
    %v412 = vsub.s32 0, %v411
    %v413 = vrot.slane %v112, %v412
    %v418 = vadd.f32 %v390, %v401
    %v419 = vadd.f32 %v391, %v405
    %v420 = vadd.f32 %v392, %v409
    %v421 = vadd.f32 %v393, %v413
    %vm422 = vcmask 64512
    %v423 = vsel %vm422, %v418, -inf
    %424 = vmax.xlane.f32.xlu0 %v423
    %v425 = vpop.xlane.xlu0 %424
    %v426 = vsel %vm422, %v419, -inf
    %427 = vmax.xlane.f32.xlu0 %v426
    %v428 = vpop.xlane.xlu0 %427
    %v429 = vsel %vm422, %v420, -inf
    %430 = vmax.xlane.f32.xlu0 %v429
    %v431 = vpop.xlane.xlu0 %430
    %v432 = vsel %vm422, %v421, -inf
    %433 = vmax.xlane.f32.xlu0 %v432
    %v434 = vpop.xlane.xlu0 %433
    %v435 = vsub.f32 %v418, %v425
    %v436 = vsub.f32 %v419, %v428
    %v437 = vsub.f32 %v420, %v431
    %v438 = vsub.f32 %v421, %v434
    %v439 = vmul.f32 %v435, 1.442695
    %v440 = vpow.pop %v439
    %v441 = vmul.f32 %v436, 1.442695
    %v442 = vpow.pop %v441
    %v443 = vmul.f32 %v437, 1.442695
    %v444 = vpow.pop %v443
    %v445 = vmul.f32 %v438, 1.442695
    %v446 = vpow.pop %v445
    %v447 = vsel %vm422, %v440, 0.0
    %448 = vadd.xlane.f32.xlu0 %v447
    %v449 = vpop.xlane.xlu0 %448
    %v450 = vsel %vm422, %v442, 0.0
    %451 = vadd.xlane.f32.xlu0 %v450
    %v452 = vpop.xlane.xlu0 %451
    %v453 = vsel %vm422, %v444, 0.0
    %454 = vadd.xlane.f32.xlu0 %v453
    %v455 = vpop.xlane.xlu0 %454
    %v456 = vsel %vm422, %v446, 0.0
    %457 = vadd.xlane.f32.xlu0 %v456
    %v458 = vpop.xlane.xlu0 %457
    %v459 = vrcp.pop %v449
    %v460 = vrcp.pop %v452
    %v461 = vrcp.pop %v455
    %v462 = vrcp.pop %v458
    %v463 = vmul.f32 %v440, %v459
    %v464 = vmul.f32 %v442, %v460
    %v465 = vmul.f32 %v444, %v461
    %v466 = vmul.f32 %v446, %v462
    %v467 = vpack.c.bf16 %v463, %v463
    %v468 = vpack.c.bf16 %v464, %v464
    %v469 = vpack.c.bf16 %v465, %v465
    %v470 = vpack.c.bf16 %v466, %v466
    %471 = vrot.lane.b32.xlu0 %v189, 64
    %v472 = vpop.permute.xlu0 %471
    %v474 = vsel %vm422, %v467, 0
    %vm476 = vcmask 1043456
    %v478 = vsel %vm476, %v472, 0
    %480 = vmatprep.subr.bf16.mxu0 0
    %481 = vmatpush1.bf16.msra.mxu0 %v478
    %482 = vmatprep.subr.bf16.mxu0 0
    %483 = vmatpush1.bf16.msra.mxu0 0
    %484 = vmatprep.subr.bf16.mxu0 0
    %485 = vmatpush1.bf16.msra.mxu0 0
    %486 = vmatprep.subr.bf16.mxu0 0
    %487 = vmatpush1.bf16.msra.mxu0 0
    %488 = vmatprep.subr.bf16.mxu0 0
    %489 = vmatpush1.bf16.msra.mxu0 0
    %490 = vmatprep.subr.bf16.mxu0 0
    %491 = vmatpush1.bf16.msra.mxu0 0
    %492 = vmatprep.subr.bf16.mxu0 0
    %493 = vmatpush1.bf16.msra.mxu0 0
    %494 = vmatprep.subr.bf16.mxu0 0
    %495 = vmatpush1.bf16.msra.mxu0 0
    %496 = vmatprep.subr.bf16.mxu0 0
    %497 = vmatpush1.bf16.msra.mxu0 0
    %498 = vmatprep.subr.bf16.mxu0 0
    %499 = vmatpush1.bf16.msra.mxu0 0
    %500 = vmatprep.subr.bf16.mxu0 0
    %501 = vmatpush1.bf16.msra.mxu0 0
    %502 = vmatprep.subr.bf16.mxu0 0
    %503 = vmatpush1.bf16.msra.mxu0 0
    %504 = vmatprep.subr.bf16.mxu0 0
    %505 = vmatpush1.bf16.msra.mxu0 0
    %506 = vmatprep.subr.bf16.mxu0 0
    %507 = vmatpush1.bf16.msra.mxu0 0
    %508 = vmatprep.subr.bf16.mxu0 0
    %509 = vmatpush1.bf16.msra.mxu0 0
    %510 = vmatprep.subr.bf16.mxu0 0
    %511 = vmatpush1.bf16.msra.mxu0 0
    %512 = vmatprep.mubr.bf16.mxu0 0
    %513 = vmatmul.mubr.bf16.gmra.mrb[0].mxu0 %v474
    %v514 = vpop.f32.mrb[0].mxu0
    %v515 = vadd.f32 0.0, %v514
    %v516 = vpop.f32.mrb[0].mxu0
    %v517 = vpop.f32.mrb[0].mxu0
    %v518 = vpop.f32.mrb[0].mxu0
    %519 = vdwg.mxu0
    %520 = vrot.lane.b32.xlu0 %v190, 64
    %v521 = vpop.permute.xlu0 %520
    %v523 = vsel %vm422, %v468, 0
    %v526 = vsel %vm476, %v521, 0
    %528 = vmatprep.subr.bf16.mxu0 0
    %529 = vmatpush1.bf16.msra.mxu0 %v526
    %530 = vmatprep.subr.bf16.mxu0 0
    %531 = vmatpush1.bf16.msra.mxu0 0
    %532 = vmatprep.subr.bf16.mxu0 0
    %533 = vmatpush1.bf16.msra.mxu0 0
    %534 = vmatprep.subr.bf16.mxu0 0
    %535 = vmatpush1.bf16.msra.mxu0 0
    %536 = vmatprep.subr.bf16.mxu0 0
    %537 = vmatpush1.bf16.msra.mxu0 0
    %538 = vmatprep.subr.bf16.mxu0 0
    %539 = vmatpush1.bf16.msra.mxu0 0
    %540 = vmatprep.subr.bf16.mxu0 0
    %541 = vmatpush1.bf16.msra.mxu0 0
    %542 = vmatprep.subr.bf16.mxu0 0
    %543 = vmatpush1.bf16.msra.mxu0 0
    %544 = vmatprep.subr.bf16.mxu0 0
    %545 = vmatpush1.bf16.msra.mxu0 0
    %546 = vmatprep.subr.bf16.mxu0 0
    %547 = vmatpush1.bf16.msra.mxu0 0
    %548 = vmatprep.subr.bf16.mxu0 0
    %549 = vmatpush1.bf16.msra.mxu0 0
    %550 = vmatprep.subr.bf16.mxu0 0
    %551 = vmatpush1.bf16.msra.mxu0 0
    %552 = vmatprep.subr.bf16.mxu0 0
    %553 = vmatpush1.bf16.msra.mxu0 0
    %554 = vmatprep.subr.bf16.mxu0 0
    %555 = vmatpush1.bf16.msra.mxu0 0
    %556 = vmatprep.subr.bf16.mxu0 0
    %557 = vmatpush1.bf16.msra.mxu0 0
    %558 = vmatprep.subr.bf16.mxu0 0
    %559 = vmatpush1.bf16.msra.mxu0 0
    %560 = vmatprep.mubr.bf16.mxu0 0
    %561 = vmatmul.mubr.bf16.gmra.mrb[0].mxu0 %v523
    %v562 = vpop.f32.mrb[0].mxu0
    %v563 = vadd.f32 0.0, %v562
    %v564 = vpop.f32.mrb[0].mxu0
    %v565 = vpop.f32.mrb[0].mxu0
    %v566 = vpop.f32.mrb[0].mxu0
    %567 = vdwg.mxu0
    %568 = vrot.lane.b32.xlu0 %v191, 64
    %v569 = vpop.permute.xlu0 %568
    %v571 = vsel %vm422, %v469, 0
    %v574 = vsel %vm476, %v569, 0
    %576 = vmatprep.subr.bf16.mxu0 0
    %577 = vmatpush1.bf16.msra.mxu0 %v574
    %578 = vmatprep.subr.bf16.mxu0 0
    %579 = vmatpush1.bf16.msra.mxu0 0
    %580 = vmatprep.subr.bf16.mxu0 0
    %581 = vmatpush1.bf16.msra.mxu0 0
    %582 = vmatprep.subr.bf16.mxu0 0
    %583 = vmatpush1.bf16.msra.mxu0 0
    %584 = vmatprep.subr.bf16.mxu0 0
    %585 = vmatpush1.bf16.msra.mxu0 0
    %586 = vmatprep.subr.bf16.mxu0 0
    %587 = vmatpush1.bf16.msra.mxu0 0
    %588 = vmatprep.subr.bf16.mxu0 0
    %589 = vmatpush1.bf16.msra.mxu0 0
    %590 = vmatprep.subr.bf16.mxu0 0
    %591 = vmatpush1.bf16.msra.mxu0 0
    %592 = vmatprep.subr.bf16.mxu0 0
    %593 = vmatpush1.bf16.msra.mxu0 0
    %594 = vmatprep.subr.bf16.mxu0 0
    %595 = vmatpush1.bf16.msra.mxu0 0
    %596 = vmatprep.subr.bf16.mxu0 0
    %597 = vmatpush1.bf16.msra.mxu0 0
    %598 = vmatprep.subr.bf16.mxu0 0
    %599 = vmatpush1.bf16.msra.mxu0 0
    %600 = vmatprep.subr.bf16.mxu0 0
    %601 = vmatpush1.bf16.msra.mxu0 0
    %602 = vmatprep.subr.bf16.mxu0 0
    %603 = vmatpush1.bf16.msra.mxu0 0
    %604 = vmatprep.subr.bf16.mxu0 0
    %605 = vmatpush1.bf16.msra.mxu0 0
    %606 = vmatprep.subr.bf16.mxu0 0
    %607 = vmatpush1.bf16.msra.mxu0 0
    %608 = vmatprep.mubr.bf16.mxu0 0
    %609 = vmatmul.mubr.bf16.gmra.mrb[0].mxu0 %v571
    %v610 = vpop.f32.mrb[0].mxu0
    %v611 = vadd.f32 0.0, %v610
    %v612 = vpop.f32.mrb[0].mxu0
    %v613 = vpop.f32.mrb[0].mxu0
    %v614 = vpop.f32.mrb[0].mxu0
    %615 = vdwg.mxu0
    %616 = vrot.lane.b32.xlu0 %v192, 64
    %v617 = vpop.permute.xlu0 %616
    %v619 = vsel %vm422, %v470, 0
    %v622 = vsel %vm476, %v617, 0
    %624 = vmatprep.subr.bf16.mxu0 0
    %625 = vmatpush1.bf16.msra.mxu0 %v622
    %626 = vmatprep.subr.bf16.mxu0 0
    %627 = vmatpush1.bf16.msra.mxu0 0
    %628 = vmatprep.subr.bf16.mxu0 0
    %629 = vmatpush1.bf16.msra.mxu0 0
    %630 = vmatprep.subr.bf16.mxu0 0
    %631 = vmatpush1.bf16.msra.mxu0 0
    %632 = vmatprep.subr.bf16.mxu0 0
    %633 = vmatpush1.bf16.msra.mxu0 0
    %634 = vmatprep.subr.bf16.mxu0 0
    %635 = vmatpush1.bf16.msra.mxu0 0
    %636 = vmatprep.subr.bf16.mxu0 0
    %637 = vmatpush1.bf16.msra.mxu0 0
    %638 = vmatprep.subr.bf16.mxu0 0
    %639 = vmatpush1.bf16.msra.mxu0 0
    %640 = vmatprep.subr.bf16.mxu0 0
    %641 = vmatpush1.bf16.msra.mxu0 0
    %642 = vmatprep.subr.bf16.mxu0 0
    %643 = vmatpush1.bf16.msra.mxu0 0
    %644 = vmatprep.subr.bf16.mxu0 0
    %645 = vmatpush1.bf16.msra.mxu0 0
    %646 = vmatprep.subr.bf16.mxu0 0
    %647 = vmatpush1.bf16.msra.mxu0 0
    %648 = vmatprep.subr.bf16.mxu0 0
    %649 = vmatpush1.bf16.msra.mxu0 0
    %650 = vmatprep.subr.bf16.mxu0 0
    %651 = vmatpush1.bf16.msra.mxu0 0
    %652 = vmatprep.subr.bf16.mxu0 0
    %653 = vmatpush1.bf16.msra.mxu0 0
    %654 = vmatprep.subr.bf16.mxu0 0
    %655 = vmatpush1.bf16.msra.mxu0 0
    %656 = vmatprep.mubr.bf16.mxu0 0
    %657 = vmatmul.mubr.bf16.gmra.mrb[0].mxu0 %v619
    %v658 = vpop.f32.mrb[0].mxu0
    %v659 = vadd.f32 0.0, %v658
    %v660 = vpop.f32.mrb[0].mxu0
    %v661 = vpop.f32.mrb[0].mxu0
    %v662 = vpop.f32.mrb[0].mxu0
    %663 = vdwg.mxu0
    %665 = vrot.lane.b32.xlu0 %v563, 16
    %v666 = vpop.permute.xlu0 %665
    %v668 = vsel %vm196, %v515, %v666
    %670 = vrot.lane.b32.xlu0 %v659, 16
    %v671 = vpop.permute.xlu0 %670
    %v673 = vsel %vm196, %v611, %v671
    %v674 = vpack.c.bf16 %v673, %v668
    %v675 = vld [vmem:[%s6] sm:$0xf]
    %v676 = vld [vmem:[%s6 + $0x4] sm:$0xf]
    %v677 = vld [vmem:[%s6 + $0x8] sm:$0xf]
    %v678 = vld [vmem:[%s6 + $0xc] sm:$0xf]
    %v679 = vld [vmem:[%s7] sm:$0x1]
    %v681 = vlaneseq
    %v682 = vshrl.u32 %v681, 7
    %v683 = vsub.s32 0, %v682
    %v684 = vrot.slane %v679, %v683
    %v690 = vunpack.c.l.b16 %v675
    %v691 = vunpack.c.l.b16 %v676
    %v692 = vunpack.c.l.b16 %v677
    %v693 = vunpack.c.l.b16 %v678
    %v694 = vpack.c.b16 %v691, %v690
    %v695 = vpack.c.b16 %v693, %v692
    %v699 = vsel %vm65, %v674, 0
    %701 = vmatprep.subr.bf16.mxu0 0
    %702 = vmatpush1.bf16.msra.mxu0 %v694
    %703 = vmatprep.subr.bf16.mxu0 0
    %704 = vmatpush1.bf16.msra.mxu0 %v695
    %705 = vmatprep.subr.bf16.mxu0 0
    %706 = vmatpush1.bf16.msra.mxu0 0
    %707 = vmatprep.subr.bf16.mxu0 0
    %708 = vmatpush1.bf16.msra.mxu0 0
    %709 = vmatprep.subr.bf16.mxu0 0
    %710 = vmatpush1.bf16.msra.mxu0 0
    %711 = vmatprep.subr.bf16.mxu0 0
    %712 = vmatpush1.bf16.msra.mxu0 0
    %713 = vmatprep.subr.bf16.mxu0 0
    %714 = vmatpush1.bf16.msra.mxu0 0
    %715 = vmatprep.subr.bf16.mxu0 0
    %716 = vmatpush1.bf16.msra.mxu0 0
    %717 = vmatprep.subr.bf16.mxu0 0
    %718 = vmatpush1.bf16.msra.mxu0 0
    %719 = vmatprep.subr.bf16.mxu0 0
    %720 = vmatpush1.bf16.msra.mxu0 0
    %721 = vmatprep.subr.bf16.mxu0 0
    %722 = vmatpush1.bf16.msra.mxu0 0
    %723 = vmatprep.subr.bf16.mxu0 0
    %724 = vmatpush1.bf16.msra.mxu0 0
    %725 = vmatprep.subr.bf16.mxu0 0
    %726 = vmatpush1.bf16.msra.mxu0 0
    %727 = vmatprep.subr.bf16.mxu0 0
    %728 = vmatpush1.bf16.msra.mxu0 0
    %729 = vmatprep.subr.bf16.mxu0 0
    %730 = vmatpush1.bf16.msra.mxu0 0
    %731 = vmatprep.subr.bf16.mxu0 0
    %732 = vmatpush1.bf16.msra.mxu0 0
    %733 = vmatprep.mubr.bf16.mxu0 0
    %734 = vmatmul.mubr.bf16.gmra.mrb[0].mxu0 %v699
    %v735 = vpop.f32.mrb[0].mxu0
    %v736 = vadd.f32 %v684, %v735
    %v737 = vpop.f32.mrb[0].mxu0
    %v738 = vpop.f32.mrb[0].mxu0
    %v739 = vadd.f32 %v684, %v738
    %v740 = vpop.f32.mrb[0].mxu0
    %741 = vdwg.mxu0
    %v742 = vadd.f32 %v736, %v107
    %v743 = vadd.f32 %v739, %v108
    %v744 = vld [vmem:[%s8] sm:$0x1]
    %v745 = vld [vmem:[%s9] sm:$0x1]
    %v746 = vsel %vm65, %v742, 0.0
    %747 = vadd.xlane.f32.xlu0 %v746
    %v748 = vpop.xlane.xlu0 %747
    %v749 = vsel %vm65, %v743, 0.0
    %750 = vadd.xlane.f32.xlu0 %v749
    %v751 = vpop.xlane.xlu0 %750
    %v752 = vmul.f32 %v748, %v72
    %v753 = vmul.f32 %v751, %v72
    %v754 = vsub.f32 %v742, %v752
    %v755 = vsub.f32 %v743, %v753
    %v756 = vmul.f32 %v754, %v754
    %v757 = vmul.f32 %v755, %v755
    %v758 = vsel %vm65, %v756, 0.0
    %759 = vadd.xlane.f32.xlu0 %v758
    %v760 = vpop.xlane.xlu0 %759
    %v761 = vsel %vm65, %v757, 0.0
    %762 = vadd.xlane.f32.xlu0 %v761
    %v763 = vpop.xlane.xlu0 %762
    %v764 = vmul.f32 %v760, %v72
    %v765 = vmul.f32 %v763, %v72
    %v766 = vadd.f32 %v764, 1e-12
    %v767 = vadd.f32 %v765, 1e-12
    %v768 = vrsqrt.pop %v766
    %v769 = vrsqrt.pop %v767
    %v770 = vmul.f32 %v754, %v768
    %v771 = vmul.f32 %v755, %v769
    %v773 = vlaneseq
    %v774 = vshrl.u32 %v773, 7
    %v775 = vsub.s32 0, %v774
    %v776 = vrot.slane %v744, %v775
    %v778 = vmul.f32 %v770, %v776
    %v779 = vmul.f32 %v771, %v776
    %v781 = vlaneseq
    %v782 = vshrl.u32 %v781, 7
    %v783 = vsub.s32 0, %v782
    %v784 = vrot.slane %v745, %v783
    %v786 = vadd.f32 %v778, %v784
    %v787 = vadd.f32 %v779, %v784
    %v788 = vpack.c.bf16 %v787, %v786
    %v789 = vld [vmem:[%s10] sm:$0xf]
    %v790 = vld [vmem:[%s10 + $0x4] sm:$0xf]
    %v791 = vld [vmem:[%s10 + $0x8] sm:$0xf]
    %v792 = vld [vmem:[%s10 + $0xc] sm:$0xf]
    %v793 = vld [vmem:[%s11] sm:$0x1]
    %v795 = vlaneseq
    %v796 = vshrl.u32 %v795, 7
    %v797 = vsub.s32 0, %v796
    %v798 = vrot.slane %v793, %v797
    %v804 = vunpack.c.l.b16 %v789
    %v805 = vunpack.c.l.b16 %v790
    %v806 = vunpack.c.l.b16 %v791
    %v807 = vunpack.c.l.b16 %v792
    %v808 = vpack.c.b16 %v805, %v804
    %v809 = vpack.c.b16 %v807, %v806
    %v813 = vsel %vm65, %v788, 0
    %815 = vmatprep.subr.bf16.mxu0 0
    %816 = vmatpush1.bf16.msra.mxu0 %v808
    %817 = vmatprep.subr.bf16.mxu0 0
    %818 = vmatpush1.bf16.msra.mxu0 %v809
    %819 = vmatprep.subr.bf16.mxu0 0
    %820 = vmatpush1.bf16.msra.mxu0 0
    %821 = vmatprep.subr.bf16.mxu0 0
    %822 = vmatpush1.bf16.msra.mxu0 0
    %823 = vmatprep.subr.bf16.mxu0 0
    %824 = vmatpush1.bf16.msra.mxu0 0
    %825 = vmatprep.subr.bf16.mxu0 0
    %826 = vmatpush1.bf16.msra.mxu0 0
    %827 = vmatprep.subr.bf16.mxu0 0
    %828 = vmatpush1.bf16.msra.mxu0 0
    %829 = vmatprep.subr.bf16.mxu0 0
    %830 = vmatpush1.bf16.msra.mxu0 0
    %831 = vmatprep.subr.bf16.mxu0 0
    %832 = vmatpush1.bf16.msra.mxu0 0
    %833 = vmatprep.subr.bf16.mxu0 0
    %834 = vmatpush1.bf16.msra.mxu0 0
    %835 = vmatprep.subr.bf16.mxu0 0
    %836 = vmatpush1.bf16.msra.mxu0 0
    %837 = vmatprep.subr.bf16.mxu0 0
    %838 = vmatpush1.bf16.msra.mxu0 0
    %839 = vmatprep.subr.bf16.mxu0 0
    %840 = vmatpush1.bf16.msra.mxu0 0
    %841 = vmatprep.subr.bf16.mxu0 0
    %842 = vmatpush1.bf16.msra.mxu0 0
    %843 = vmatprep.subr.bf16.mxu0 0
    %844 = vmatpush1.bf16.msra.mxu0 0
    %845 = vmatprep.subr.bf16.mxu0 0
    %846 = vmatpush1.bf16.msra.mxu0 0
    %847 = vmatprep.mubr.bf16.mxu0 0
    %848 = vmatmul.mubr.bf16.gmra.mrb[0].mxu0 %v813
    %v849 = vpop.f32.mrb[0].mxu0
    %v850 = vadd.f32 %v798, %v849
    %v851 = vpop.f32.mrb[0].mxu0
    %v852 = vpop.f32.mrb[0].mxu0
    %v853 = vadd.f32 %v798, %v852
    %v854 = vpop.f32.mrb[0].mxu0
    %855 = vdwg.mxu0
    %v856 = vmul.f32 %v850, 0.5
    %v857 = vmul.f32 %v853, 0.5
    %v858 = vmul.f32 %v850, 0.044715
    %v859 = vmul.f32 %v853, 0.044715
    %v860 = vmul.f32 %v858, %v850
    %v861 = vmul.f32 %v859, %v853
    %v862 = vmul.f32 %v860, %v850
    %v863 = vmul.f32 %v861, %v853
    %v864 = vadd.f32 %v850, %v862
    %v865 = vadd.f32 %v853, %v863
    %v866 = vmul.f32 %v864, 0.7978846
    %v867 = vmul.f32 %v865, 0.7978846
    %v868 = vtanh.pop %v866
    %v869 = vtanh.pop %v867
    %v870 = vadd.f32 %v868, 1.0
    %v871 = vadd.f32 %v869, 1.0
    %v872 = vmul.f32 %v856, %v870
    %v873 = vmul.f32 %v857, %v871
    %v874 = vpack.c.bf16 %v873, %v872
    %v875 = vld [vmem:[%s12] sm:$0xf]
    %v876 = vld [vmem:[%s12 + $0x4] sm:$0xf]
    %v877 = vld [vmem:[%s12 + $0x8] sm:$0xf]
    %v878 = vld [vmem:[%s12 + $0xc] sm:$0xf]
    %v879 = vld [vmem:[%s12 + $0x10] sm:$0xf]
    %v880 = vld [vmem:[%s12 + $0x14] sm:$0xf]
    %v881 = vld [vmem:[%s12 + $0x18] sm:$0xf]
    %v882 = vld [vmem:[%s12 + $0x1c] sm:$0xf]
    %v883 = vld [vmem:[%s13] sm:$0x1]
    %v885 = vlaneseq
    %v886 = vshrl.u32 %v885, 7
    %v887 = vsub.s32 0, %v886
    %v888 = vrot.slane %v883, %v887
    %v898 = vunpack.c.l.b16 %v875
    %v899 = vunpack.c.l.b16 %v876
    %v900 = vunpack.c.l.b16 %v877
    %v901 = vunpack.c.l.b16 %v878
    %v902 = vunpack.c.l.b16 %v879
    %v903 = vunpack.c.l.b16 %v880
    %v904 = vunpack.c.l.b16 %v881
    %v905 = vunpack.c.l.b16 %v882
    %v906 = vpack.c.b16 %v899, %v898
    %v907 = vpack.c.b16 %v901, %v900
    %v908 = vpack.c.b16 %v903, %v902
    %v909 = vpack.c.b16 %v905, %v904
    %vm914 = vcmask 523264
    %v916 = vsel %vm914, %v874, 0
    %918 = vmatprep.subr.bf16.mxu0 0
    %919 = vmatpush1.bf16.msra.mxu0 %v906
    %920 = vmatprep.subr.bf16.mxu0 0
    %921 = vmatpush1.bf16.msra.mxu0 %v907
    %922 = vmatprep.subr.bf16.mxu0 0
    %923 = vmatpush1.bf16.msra.mxu0 %v908
    %924 = vmatprep.subr.bf16.mxu0 0
    %925 = vmatpush1.bf16.msra.mxu0 %v909
    %926 = vmatprep.subr.bf16.mxu0 0
    %927 = vmatpush1.bf16.msra.mxu0 0
    %928 = vmatprep.subr.bf16.mxu0 0
    %929 = vmatpush1.bf16.msra.mxu0 0
    %930 = vmatprep.subr.bf16.mxu0 0
    %931 = vmatpush1.bf16.msra.mxu0 0
    %932 = vmatprep.subr.bf16.mxu0 0
    %933 = vmatpush1.bf16.msra.mxu0 0
    %934 = vmatprep.subr.bf16.mxu0 0
    %935 = vmatpush1.bf16.msra.mxu0 0
    %936 = vmatprep.subr.bf16.mxu0 0
    %937 = vmatpush1.bf16.msra.mxu0 0
    %938 = vmatprep.subr.bf16.mxu0 0
    %939 = vmatpush1.bf16.msra.mxu0 0
    %940 = vmatprep.subr.bf16.mxu0 0
    %941 = vmatpush1.bf16.msra.mxu0 0
    %942 = vmatprep.subr.bf16.mxu0 0
    %943 = vmatpush1.bf16.msra.mxu0 0
    %944 = vmatprep.subr.bf16.mxu0 0
    %945 = vmatpush1.bf16.msra.mxu0 0
    %946 = vmatprep.subr.bf16.mxu0 0
    %947 = vmatpush1.bf16.msra.mxu0 0
    %948 = vmatprep.subr.bf16.mxu0 0
    %949 = vmatpush1.bf16.msra.mxu0 0
    %950 = vmatprep.mubr.bf16.mxu0 0
    %951 = vmatmul.mubr.bf16.gmra.mrb[0].mxu0 %v916
    %v952 = vpop.f32.mrb[0].mxu0
    %v953 = vadd.f32 %v888, %v952
    %v954 = vpop.f32.mrb[0].mxu0
    %v955 = vpop.f32.mrb[0].mxu0
    %v956 = vadd.f32 %v888, %v955
    %v957 = vpop.f32.mrb[0].mxu0
    %958 = vdwg.mxu0
    %v959 = vadd.f32 %v953, %v786
    %v960 = vadd.f32 %v956, %v787
    %v961 = vld [vmem:[%s14] sm:$0x1]
    %v962 = vld [vmem:[%s15] sm:$0x1]
    %v963 = vsel %vm65, %v959, 0.0
    %964 = vadd.xlane.f32.xlu0 %v963
    %v965 = vpop.xlane.xlu0 %964
    %v966 = vsel %vm65, %v960, 0.0
    %967 = vadd.xlane.f32.xlu0 %v966
    %v968 = vpop.xlane.xlu0 %967
    %v969 = vmul.f32 %v965, %v72
    %v970 = vmul.f32 %v968, %v72
    %v971 = vsub.f32 %v959, %v969
    %v972 = vsub.f32 %v960, %v970
    %v973 = vmul.f32 %v971, %v971
    %v974 = vmul.f32 %v972, %v972
    %v975 = vsel %vm65, %v973, 0.0
    %976 = vadd.xlane.f32.xlu0 %v975
    %v977 = vpop.xlane.xlu0 %976
    %v978 = vsel %vm65, %v974, 0.0
    %979 = vadd.xlane.f32.xlu0 %v978
    %v980 = vpop.xlane.xlu0 %979
    %v981 = vmul.f32 %v977, %v72
    %v982 = vmul.f32 %v980, %v72
    %v983 = vadd.f32 %v981, 1e-12
    %v984 = vadd.f32 %v982, 1e-12
    %v985 = vrsqrt.pop %v983
    %v986 = vrsqrt.pop %v984
    %v987 = vmul.f32 %v971, %v985
    %v988 = vmul.f32 %v972, %v986
    %v990 = vlaneseq
    %v991 = vshrl.u32 %v990, 7
    %v992 = vsub.s32 0, %v991
    %v993 = vrot.slane %v961, %v992
    %v995 = vmul.f32 %v987, %v993
    %v996 = vmul.f32 %v988, %v993
    %v998 = vlaneseq
    %v999 = vshrl.u32 %v998, 7
    %v1000 = vsub.s32 0, %v999
    %v1001 = vrot.slane %v962, %v1000
    %v1003 = vadd.f32 %v995, %v1001
    %v1004 = vadd.f32 %v996, %v1001
    %v1005 = vpack.c.bf16 %v1004, %v1003
    %s1006 = scalar_lea.vmem %s4, 16
    %v1007 = vld [vmem:[%s1006] sm:$0xf]
    %v1008 = vld [vmem:[%s1006 + $0x4] sm:$0xf]
    %v1009 = vld [vmem:[%s1006 + $0x8] sm:$0xf]
    %v1010 = vld [vmem:[%s1006 + $0xc] sm:$0xf]
    %s1011 = scalar_lea.vmem %s5, 1
    %v1012 = vld [vmem:[%s1011] sm:$0x1]
    %v1014 = vlaneseq
    %v1015 = vshrl.u32 %v1014, 7
    %v1016 = vsub.s32 0, %v1015
    %v1017 = vrot.slane %v1012, %v1016
    %v1023 = vunpack.c.l.b16 %v1007
    %v1024 = vunpack.c.l.b16 %v1008
    %v1025 = vunpack.c.l.b16 %v1009
    %v1026 = vunpack.c.l.b16 %v1010
    %v1027 = vpack.c.b16 %v1024, %v1023
    %v1028 = vpack.c.b16 %v1026, %v1025
    %v1032 = vsel %vm65, %v1005, 0
    %1034 = vmatprep.subr.bf16.mxu0 0
    %1035 = vmatpush1.bf16.msra.mxu0 %v1027
    %1036 = vmatprep.subr.bf16.mxu0 0
    %1037 = vmatpush1.bf16.msra.mxu0 %v1028
    %1038 = vmatprep.subr.bf16.mxu0 0
    %1039 = vmatpush1.bf16.msra.mxu0 0
    %1040 = vmatprep.subr.bf16.mxu0 0
    %1041 = vmatpush1.bf16.msra.mxu0 0
    %1042 = vmatprep.subr.bf16.mxu0 0
    %1043 = vmatpush1.bf16.msra.mxu0 0
    %1044 = vmatprep.subr.bf16.mxu0 0
    %1045 = vmatpush1.bf16.msra.mxu0 0
    %1046 = vmatprep.subr.bf16.mxu0 0
    %1047 = vmatpush1.bf16.msra.mxu0 0
    %1048 = vmatprep.subr.bf16.mxu0 0
    %1049 = vmatpush1.bf16.msra.mxu0 0
    %1050 = vmatprep.subr.bf16.mxu0 0
    %1051 = vmatpush1.bf16.msra.mxu0 0
    %1052 = vmatprep.subr.bf16.mxu0 0
    %1053 = vmatpush1.bf16.msra.mxu0 0
    %1054 = vmatprep.subr.bf16.mxu0 0
    %1055 = vmatpush1.bf16.msra.mxu0 0
    %1056 = vmatprep.subr.bf16.mxu0 0
    %1057 = vmatpush1.bf16.msra.mxu0 0
    %1058 = vmatprep.subr.bf16.mxu0 0
    %1059 = vmatpush1.bf16.msra.mxu0 0
    %1060 = vmatprep.subr.bf16.mxu0 0
    %1061 = vmatpush1.bf16.msra.mxu0 0
    %1062 = vmatprep.subr.bf16.mxu0 0
    %1063 = vmatpush1.bf16.msra.mxu0 0
    %1064 = vmatprep.subr.bf16.mxu0 0
    %1065 = vmatpush1.bf16.msra.mxu0 0
    %1066 = vmatprep.mubr.bf16.mxu0 0
    %1067 = vmatmul.mubr.bf16.gmra.mrb[0].mxu0 %v1032
    %v1068 = vpop.f32.mrb[0].mxu0
    %v1069 = vadd.f32 %v1017, %v1068
    %v1070 = vpop.f32.mrb[0].mxu0
    %v1071 = vpop.f32.mrb[0].mxu0
    %v1072 = vadd.f32 %v1017, %v1071
    %v1073 = vpop.f32.mrb[0].mxu0
    %1074 = vdwg.mxu0
    %1076 = vrot.lane.b32.xlu0 %v1069, 112
    %v1077 = vpop.permute.xlu0 %1076
    %1080 = vrot.lane.b32.xlu0 %v1072, 112
    %v1081 = vpop.permute.xlu0 %1080
    %v1083 = vpack.c.bf16 %v1069, %v1069
    %v1084 = vpack.c.bf16 %v1077, %v1077
    %v1085 = vpack.c.bf16 %v1072, %v1072
    %v1086 = vpack.c.bf16 %v1081, %v1081
    %1088 = vrot.lane.b32.xlu0 %v1083, 96
    %v1089 = vpop.permute.xlu0 %1088
    %v1091 = vsel %vm196, %v1083, 0
    %v1094 = vsel %vm196, %v1089, 0
    %1096 = vmatprep.subr.bf16.mxu0 0
    %1097 = vmatpush1.bf16.xpose.msra.mxu0 %v1094
    %1098 = vmatprep.subr.bf16.mxu0 0
    %1099 = vmatpush1.bf16.xpose.msra.mxu0 0
    %1100 = vmatprep.subr.bf16.mxu0 0
    %1101 = vmatpush1.bf16.xpose.msra.mxu0 0
    %1102 = vmatprep.subr.bf16.mxu0 0
    %1103 = vmatpush1.bf16.xpose.msra.mxu0 0
    %1104 = vmatprep.subr.bf16.mxu0 0
    %1105 = vmatpush1.bf16.xpose.msra.mxu0 0
    %1106 = vmatprep.subr.bf16.mxu0 0
    %1107 = vmatpush1.bf16.xpose.msra.mxu0 0
    %1108 = vmatprep.subr.bf16.mxu0 0
    %1109 = vmatpush1.bf16.xpose.msra.mxu0 0
    %1110 = vmatprep.subr.bf16.mxu0 0
    %1111 = vmatpush1.bf16.xpose.msra.mxu0 0
    %1112 = vmatprep.subr.bf16.mxu0 0
    %1113 = vmatpush1.bf16.xpose.msra.mxu0 0
    %1114 = vmatprep.subr.bf16.mxu0 0
    %1115 = vmatpush1.bf16.xpose.msra.mxu0 0
    %1116 = vmatprep.subr.bf16.mxu0 0
    %1117 = vmatpush1.bf16.xpose.msra.mxu0 0
    %1118 = vmatprep.subr.bf16.mxu0 0
    %1119 = vmatpush1.bf16.xpose.msra.mxu0 0
    %1120 = vmatprep.subr.bf16.mxu0 0
    %1121 = vmatpush1.bf16.xpose.msra.mxu0 0
    %1122 = vmatprep.subr.bf16.mxu0 0
    %1123 = vmatpush1.bf16.xpose.msra.mxu0 0
    %1124 = vmatprep.subr.bf16.mxu0 0
    %1125 = vmatpush1.bf16.xpose.msra.mxu0 0
    %1126 = vmatprep.subr.bf16.mxu0 0
    %1127 = vmatpush1.bf16.xpose.msra.mxu0 0
    %1128 = vmatprep.mubr.bf16.mxu0 0
    %1129 = vmatmul.mubr.bf16.gmra.mrb[0].mxu0 %v1091
    %v1130 = vpop.f32.mrb[0].mxu0
    %v1131 = vadd.f32 0.0, %v1130
    %v1132 = vpop.f32.mrb[0].mxu0
    %v1133 = vpop.f32.mrb[0].mxu0
    %v1134 = vpop.f32.mrb[0].mxu0
    %1135 = vdwg.mxu0
    %1137 = vrot.lane.b32.xlu0 %v1084, 96
    %v1138 = vpop.permute.xlu0 %1137
    %v1140 = vsel %vm196, %v1084, 0
    %v1143 = vsel %vm196, %v1138, 0
    %1145 = vmatprep.subr.bf16.mxu0 0
    %1146 = vmatpush1.bf16.xpose.msra.mxu0 %v1143
    %1147 = vmatprep.subr.bf16.mxu0 0
    %1148 = vmatpush1.bf16.xpose.msra.mxu0 0
    %1149 = vmatprep.subr.bf16.mxu0 0
    %1150 = vmatpush1.bf16.xpose.msra.mxu0 0
    %1151 = vmatprep.subr.bf16.mxu0 0
    %1152 = vmatpush1.bf16.xpose.msra.mxu0 0
    %1153 = vmatprep.subr.bf16.mxu0 0
    %1154 = vmatpush1.bf16.xpose.msra.mxu0 0
    %1155 = vmatprep.subr.bf16.mxu0 0
    %1156 = vmatpush1.bf16.xpose.msra.mxu0 0
    %1157 = vmatprep.subr.bf16.mxu0 0
    %1158 = vmatpush1.bf16.xpose.msra.mxu0 0
    %1159 = vmatprep.subr.bf16.mxu0 0
    %1160 = vmatpush1.bf16.xpose.msra.mxu0 0
    %1161 = vmatprep.subr.bf16.mxu0 0
    %1162 = vmatpush1.bf16.xpose.msra.mxu0 0
    %1163 = vmatprep.subr.bf16.mxu0 0
    %1164 = vmatpush1.bf16.xpose.msra.mxu0 0
    %1165 = vmatprep.subr.bf16.mxu0 0
    %1166 = vmatpush1.bf16.xpose.msra.mxu0 0
    %1167 = vmatprep.subr.bf16.mxu0 0
    %1168 = vmatpush1.bf16.xpose.msra.mxu0 0
    %1169 = vmatprep.subr.bf16.mxu0 0
    %1170 = vmatpush1.bf16.xpose.msra.mxu0 0
    %1171 = vmatprep.subr.bf16.mxu0 0
    %1172 = vmatpush1.bf16.xpose.msra.mxu0 0
    %1173 = vmatprep.subr.bf16.mxu0 0
    %1174 = vmatpush1.bf16.xpose.msra.mxu0 0
    %1175 = vmatprep.subr.bf16.mxu0 0
    %1176 = vmatpush1.bf16.xpose.msra.mxu0 0
    %1177 = vmatprep.mubr.bf16.mxu0 0
    %1178 = vmatmul.mubr.bf16.gmra.mrb[0].mxu0 %v1140
    %v1179 = vpop.f32.mrb[0].mxu0
    %v1180 = vadd.f32 0.0, %v1179
    %v1181 = vpop.f32.mrb[0].mxu0
    %v1182 = vpop.f32.mrb[0].mxu0
    %v1183 = vpop.f32.mrb[0].mxu0
    %1184 = vdwg.mxu0
    %1186 = vrot.lane.b32.xlu0 %v1085, 96
    %v1187 = vpop.permute.xlu0 %1186
    %v1189 = vsel %vm196, %v1085, 0
    %v1192 = vsel %vm196, %v1187, 0
    %1194 = vmatprep.subr.bf16.mxu0 0
    %1195 = vmatpush1.bf16.xpose.msra.mxu0 %v1192
    %1196 = vmatprep.subr.bf16.mxu0 0
    %1197 = vmatpush1.bf16.xpose.msra.mxu0 0
    %1198 = vmatprep.subr.bf16.mxu0 0
    %1199 = vmatpush1.bf16.xpose.msra.mxu0 0
    %1200 = vmatprep.subr.bf16.mxu0 0
    %1201 = vmatpush1.bf16.xpose.msra.mxu0 0
    %1202 = vmatprep.subr.bf16.mxu0 0
    %1203 = vmatpush1.bf16.xpose.msra.mxu0 0
    %1204 = vmatprep.subr.bf16.mxu0 0
    %1205 = vmatpush1.bf16.xpose.msra.mxu0 0
    %1206 = vmatprep.subr.bf16.mxu0 0
    %1207 = vmatpush1.bf16.xpose.msra.mxu0 0
    %1208 = vmatprep.subr.bf16.mxu0 0
    %1209 = vmatpush1.bf16.xpose.msra.mxu0 0
    %1210 = vmatprep.subr.bf16.mxu0 0
    %1211 = vmatpush1.bf16.xpose.msra.mxu0 0
    %1212 = vmatprep.subr.bf16.mxu0 0
    %1213 = vmatpush1.bf16.xpose.msra.mxu0 0
    %1214 = vmatprep.subr.bf16.mxu0 0
    %1215 = vmatpush1.bf16.xpose.msra.mxu0 0
    %1216 = vmatprep.subr.bf16.mxu0 0
    %1217 = vmatpush1.bf16.xpose.msra.mxu0 0
    %1218 = vmatprep.subr.bf16.mxu0 0
    %1219 = vmatpush1.bf16.xpose.msra.mxu0 0
    %1220 = vmatprep.subr.bf16.mxu0 0
    %1221 = vmatpush1.bf16.xpose.msra.mxu0 0
    %1222 = vmatprep.subr.bf16.mxu0 0
    %1223 = vmatpush1.bf16.xpose.msra.mxu0 0
    %1224 = vmatprep.subr.bf16.mxu0 0
    %1225 = vmatpush1.bf16.xpose.msra.mxu0 0
    %1226 = vmatprep.mubr.bf16.mxu0 0
    %1227 = vmatmul.mubr.bf16.gmra.mrb[0].mxu0 %v1189
    %v1228 = vpop.f32.mrb[0].mxu0
    %v1229 = vadd.f32 0.0, %v1228
    %v1230 = vpop.f32.mrb[0].mxu0
    %v1231 = vpop.f32.mrb[0].mxu0
    %v1232 = vpop.f32.mrb[0].mxu0
    %1233 = vdwg.mxu0
    %1235 = vrot.lane.b32.xlu0 %v1086, 96
    %v1236 = vpop.permute.xlu0 %1235
    %v1238 = vsel %vm196, %v1086, 0
    %v1241 = vsel %vm196, %v1236, 0
    %1243 = vmatprep.subr.bf16.mxu0 0
    %1244 = vmatpush1.bf16.xpose.msra.mxu0 %v1241
    %1245 = vmatprep.subr.bf16.mxu0 0
    %1246 = vmatpush1.bf16.xpose.msra.mxu0 0
    %1247 = vmatprep.subr.bf16.mxu0 0
    %1248 = vmatpush1.bf16.xpose.msra.mxu0 0
    %1249 = vmatprep.subr.bf16.mxu0 0
    %1250 = vmatpush1.bf16.xpose.msra.mxu0 0
    %1251 = vmatprep.subr.bf16.mxu0 0
    %1252 = vmatpush1.bf16.xpose.msra.mxu0 0
    %1253 = vmatprep.subr.bf16.mxu0 0
    %1254 = vmatpush1.bf16.xpose.msra.mxu0 0
    %1255 = vmatprep.subr.bf16.mxu0 0
    %1256 = vmatpush1.bf16.xpose.msra.mxu0 0
    %1257 = vmatprep.subr.bf16.mxu0 0
    %1258 = vmatpush1.bf16.xpose.msra.mxu0 0
    %1259 = vmatprep.subr.bf16.mxu0 0
    %1260 = vmatpush1.bf16.xpose.msra.mxu0 0
    %1261 = vmatprep.subr.bf16.mxu0 0
    %1262 = vmatpush1.bf16.xpose.msra.mxu0 0
    %1263 = vmatprep.subr.bf16.mxu0 0
    %1264 = vmatpush1.bf16.xpose.msra.mxu0 0
    %1265 = vmatprep.subr.bf16.mxu0 0
    %1266 = vmatpush1.bf16.xpose.msra.mxu0 0
    %1267 = vmatprep.subr.bf16.mxu0 0
    %1268 = vmatpush1.bf16.xpose.msra.mxu0 0
    %1269 = vmatprep.subr.bf16.mxu0 0
    %1270 = vmatpush1.bf16.xpose.msra.mxu0 0
    %1271 = vmatprep.subr.bf16.mxu0 0
    %1272 = vmatpush1.bf16.xpose.msra.mxu0 0
    %1273 = vmatprep.subr.bf16.mxu0 0
    %1274 = vmatpush1.bf16.xpose.msra.mxu0 0
    %1275 = vmatprep.mubr.bf16.mxu0 0
    %1276 = vmatmul.mubr.bf16.gmra.mrb[0].mxu0 %v1238
    %v1277 = vpop.f32.mrb[0].mxu0
    %v1278 = vadd.f32 0.0, %v1277
    %v1279 = vpop.f32.mrb[0].mxu0
    %v1280 = vpop.f32.mrb[0].mxu0
    %v1281 = vpop.f32.mrb[0].mxu0
    %1282 = vdwg.mxu0
    %v1283 = vmul.f32 %v1131, 0.25
    %v1284 = vmul.f32 %v1180, 0.25
    %v1285 = vmul.f32 %v1229, 0.25
    %v1286 = vmul.f32 %v1278, 0.25
    %v1287 = vadd.f32 %v1283, %v401
    %v1288 = vadd.f32 %v1284, %v405
    %v1289 = vadd.f32 %v1285, %v409
    %v1290 = vadd.f32 %v1286, %v413
    %v1291 = vsel %vm422, %v1287, -inf
    %1292 = vmax.xlane.f32.xlu0 %v1291
    %v1293 = vpop.xlane.xlu0 %1292
    %v1294 = vsel %vm422, %v1288, -inf
    %1295 = vmax.xlane.f32.xlu0 %v1294
    %v1296 = vpop.xlane.xlu0 %1295
    %v1297 = vsel %vm422, %v1289, -inf
    %1298 = vmax.xlane.f32.xlu0 %v1297
    %v1299 = vpop.xlane.xlu0 %1298
    %v1300 = vsel %vm422, %v1290, -inf
    %1301 = vmax.xlane.f32.xlu0 %v1300
    %v1302 = vpop.xlane.xlu0 %1301
    %v1303 = vsub.f32 %v1287, %v1293
    %v1304 = vsub.f32 %v1288, %v1296
    %v1305 = vsub.f32 %v1289, %v1299
    %v1306 = vsub.f32 %v1290, %v1302
    %v1307 = vmul.f32 %v1303, 1.442695
    %v1308 = vpow.pop %v1307
    %v1309 = vmul.f32 %v1304, 1.442695
    %v1310 = vpow.pop %v1309
    %v1311 = vmul.f32 %v1305, 1.442695
    %v1312 = vpow.pop %v1311
    %v1313 = vmul.f32 %v1306, 1.442695
    %v1314 = vpow.pop %v1313
    %v1315 = vsel %vm422, %v1308, 0.0
    %1316 = vadd.xlane.f32.xlu0 %v1315
    %v1317 = vpop.xlane.xlu0 %1316
    %v1318 = vsel %vm422, %v1310, 0.0
    %1319 = vadd.xlane.f32.xlu0 %v1318
    %v1320 = vpop.xlane.xlu0 %1319
    %v1321 = vsel %vm422, %v1312, 0.0
    %1322 = vadd.xlane.f32.xlu0 %v1321
    %v1323 = vpop.xlane.xlu0 %1322
    %v1324 = vsel %vm422, %v1314, 0.0
    %1325 = vadd.xlane.f32.xlu0 %v1324
    %v1326 = vpop.xlane.xlu0 %1325
    %v1327 = vrcp.pop %v1317
    %v1328 = vrcp.pop %v1320
    %v1329 = vrcp.pop %v1323
    %v1330 = vrcp.pop %v1326
    %v1331 = vmul.f32 %v1308, %v1327
    %v1332 = vmul.f32 %v1310, %v1328
    %v1333 = vmul.f32 %v1312, %v1329
    %v1334 = vmul.f32 %v1314, %v1330
    %v1335 = vpack.c.bf16 %v1331, %v1331
    %v1336 = vpack.c.bf16 %v1332, %v1332
    %v1337 = vpack.c.bf16 %v1333, %v1333
    %v1338 = vpack.c.bf16 %v1334, %v1334
    %1339 = vrot.lane.b32.xlu0 %v1083, 64
    %v1340 = vpop.permute.xlu0 %1339
    %v1342 = vsel %vm422, %v1335, 0
    %v1345 = vsel %vm476, %v1340, 0
    %1347 = vmatprep.subr.bf16.mxu0 0
    %1348 = vmatpush1.bf16.msra.mxu0 %v1345
    %1349 = vmatprep.subr.bf16.mxu0 0
    %1350 = vmatpush1.bf16.msra.mxu0 0
    %1351 = vmatprep.subr.bf16.mxu0 0
    %1352 = vmatpush1.bf16.msra.mxu0 0
    %1353 = vmatprep.subr.bf16.mxu0 0
    %1354 = vmatpush1.bf16.msra.mxu0 0
    %1355 = vmatprep.subr.bf16.mxu0 0
    %1356 = vmatpush1.bf16.msra.mxu0 0
    %1357 = vmatprep.subr.bf16.mxu0 0
    %1358 = vmatpush1.bf16.msra.mxu0 0
    %1359 = vmatprep.subr.bf16.mxu0 0
    %1360 = vmatpush1.bf16.msra.mxu0 0
    %1361 = vmatprep.subr.bf16.mxu0 0
    %1362 = vmatpush1.bf16.msra.mxu0 0
    %1363 = vmatprep.subr.bf16.mxu0 0
    %1364 = vmatpush1.bf16.msra.mxu0 0
    %1365 = vmatprep.subr.bf16.mxu0 0
    %1366 = vmatpush1.bf16.msra.mxu0 0
    %1367 = vmatprep.subr.bf16.mxu0 0
    %1368 = vmatpush1.bf16.msra.mxu0 0
    %1369 = vmatprep.subr.bf16.mxu0 0
    %1370 = vmatpush1.bf16.msra.mxu0 0
    %1371 = vmatprep.subr.bf16.mxu0 0
    %1372 = vmatpush1.bf16.msra.mxu0 0
    %1373 = vmatprep.subr.bf16.mxu0 0
    %1374 = vmatpush1.bf16.msra.mxu0 0
    %1375 = vmatprep.subr.bf16.mxu0 0
    %1376 = vmatpush1.bf16.msra.mxu0 0
    %1377 = vmatprep.subr.bf16.mxu0 0
    %1378 = vmatpush1.bf16.msra.mxu0 0
    %1379 = vmatprep.mubr.bf16.mxu0 0
    %1380 = vmatmul.mubr.bf16.gmra.mrb[0].mxu0 %v1342
    %v1381 = vpop.f32.mrb[0].mxu0
    %v1382 = vadd.f32 0.0, %v1381
    %v1383 = vpop.f32.mrb[0].mxu0
    %v1384 = vpop.f32.mrb[0].mxu0
    %v1385 = vpop.f32.mrb[0].mxu0
    %1386 = vdwg.mxu0
    %1387 = vrot.lane.b32.xlu0 %v1084, 64
    %v1388 = vpop.permute.xlu0 %1387
    %v1390 = vsel %vm422, %v1336, 0
    %v1393 = vsel %vm476, %v1388, 0
    %1395 = vmatprep.subr.bf16.mxu0 0
    %1396 = vmatpush1.bf16.msra.mxu0 %v1393
    %1397 = vmatprep.subr.bf16.mxu0 0
    %1398 = vmatpush1.bf16.msra.mxu0 0
    %1399 = vmatprep.subr.bf16.mxu0 0
    %1400 = vmatpush1.bf16.msra.mxu0 0
    %1401 = vmatprep.subr.bf16.mxu0 0
    %1402 = vmatpush1.bf16.msra.mxu0 0
    %1403 = vmatprep.subr.bf16.mxu0 0
    %1404 = vmatpush1.bf16.msra.mxu0 0
    %1405 = vmatprep.subr.bf16.mxu0 0
    %1406 = vmatpush1.bf16.msra.mxu0 0
    %1407 = vmatprep.subr.bf16.mxu0 0
    %1408 = vmatpush1.bf16.msra.mxu0 0
    %1409 = vmatprep.subr.bf16.mxu0 0
    %1410 = vmatpush1.bf16.msra.mxu0 0
    %1411 = vmatprep.subr.bf16.mxu0 0
    %1412 = vmatpush1.bf16.msra.mxu0 0
    %1413 = vmatprep.subr.bf16.mxu0 0
    %1414 = vmatpush1.bf16.msra.mxu0 0
    %1415 = vmatprep.subr.bf16.mxu0 0
    %1416 = vmatpush1.bf16.msra.mxu0 0
    %1417 = vmatprep.subr.bf16.mxu0 0
    %1418 = vmatpush1.bf16.msra.mxu0 0
    %1419 = vmatprep.subr.bf16.mxu0 0
    %1420 = vmatpush1.bf16.msra.mxu0 0
    %1421 = vmatprep.subr.bf16.mxu0 0
    %1422 = vmatpush1.bf16.msra.mxu0 0
    %1423 = vmatprep.subr.bf16.mxu0 0
    %1424 = vmatpush1.bf16.msra.mxu0 0
    %1425 = vmatprep.subr.bf16.mxu0 0
    %1426 = vmatpush1.bf16.msra.mxu0 0
    %1427 = vmatprep.mubr.bf16.mxu0 0
    %1428 = vmatmul.mubr.bf16.gmra.mrb[0].mxu0 %v1390
    %v1429 = vpop.f32.mrb[0].mxu0
    %v1430 = vadd.f32 0.0, %v1429
    %v1431 = vpop.f32.mrb[0].mxu0
    %v1432 = vpop.f32.mrb[0].mxu0
    %v1433 = vpop.f32.mrb[0].mxu0
    %1434 = vdwg.mxu0
    %1435 = vrot.lane.b32.xlu0 %v1085, 64
    %v1436 = vpop.permute.xlu0 %1435
    %v1438 = vsel %vm422, %v1337, 0
    %v1441 = vsel %vm476, %v1436, 0
    %1443 = vmatprep.subr.bf16.mxu0 0
    %1444 = vmatpush1.bf16.msra.mxu0 %v1441
    %1445 = vmatprep.subr.bf16.mxu0 0
    %1446 = vmatpush1.bf16.msra.mxu0 0
    %1447 = vmatprep.subr.bf16.mxu0 0
    %1448 = vmatpush1.bf16.msra.mxu0 0
    %1449 = vmatprep.subr.bf16.mxu0 0
    %1450 = vmatpush1.bf16.msra.mxu0 0
    %1451 = vmatprep.subr.bf16.mxu0 0
    %1452 = vmatpush1.bf16.msra.mxu0 0
    %1453 = vmatprep.subr.bf16.mxu0 0
    %1454 = vmatpush1.bf16.msra.mxu0 0
    %1455 = vmatprep.subr.bf16.mxu0 0
    %1456 = vmatpush1.bf16.msra.mxu0 0
    %1457 = vmatprep.subr.bf16.mxu0 0
    %1458 = vmatpush1.bf16.msra.mxu0 0
    %1459 = vmatprep.subr.bf16.mxu0 0
    %1460 = vmatpush1.bf16.msra.mxu0 0
    %1461 = vmatprep.subr.bf16.mxu0 0
    %1462 = vmatpush1.bf16.msra.mxu0 0
    %1463 = vmatprep.subr.bf16.mxu0 0
    %1464 = vmatpush1.bf16.msra.mxu0 0
    %1465 = vmatprep.subr.bf16.mxu0 0
    %1466 = vmatpush1.bf16.msra.mxu0 0
    %1467 = vmatprep.subr.bf16.mxu0 0
    %1468 = vmatpush1.bf16.msra.mxu0 0
    %1469 = vmatprep.subr.bf16.mxu0 0
    %1470 = vmatpush1.bf16.msra.mxu0 0
    %1471 = vmatprep.subr.bf16.mxu0 0
    %1472 = vmatpush1.bf16.msra.mxu0 0
    %1473 = vmatprep.subr.bf16.mxu0 0
    %1474 = vmatpush1.bf16.msra.mxu0 0
    %1475 = vmatprep.mubr.bf16.mxu0 0
    %1476 = vmatmul.mubr.bf16.gmra.mrb[0].mxu0 %v1438
    %v1477 = vpop.f32.mrb[0].mxu0
    %v1478 = vadd.f32 0.0, %v1477
    %v1479 = vpop.f32.mrb[0].mxu0
    %v1480 = vpop.f32.mrb[0].mxu0
    %v1481 = vpop.f32.mrb[0].mxu0
    %1482 = vdwg.mxu0
    %1483 = vrot.lane.b32.xlu0 %v1086, 64
    %v1484 = vpop.permute.xlu0 %1483
    %v1486 = vsel %vm422, %v1338, 0
    %v1489 = vsel %vm476, %v1484, 0
    %1491 = vmatprep.subr.bf16.mxu0 0
    %1492 = vmatpush1.bf16.msra.mxu0 %v1489
    %1493 = vmatprep.subr.bf16.mxu0 0
    %1494 = vmatpush1.bf16.msra.mxu0 0
    %1495 = vmatprep.subr.bf16.mxu0 0
    %1496 = vmatpush1.bf16.msra.mxu0 0
    %1497 = vmatprep.subr.bf16.mxu0 0
    %1498 = vmatpush1.bf16.msra.mxu0 0
    %1499 = vmatprep.subr.bf16.mxu0 0
    %1500 = vmatpush1.bf16.msra.mxu0 0
    %1501 = vmatprep.subr.bf16.mxu0 0
    %1502 = vmatpush1.bf16.msra.mxu0 0
    %1503 = vmatprep.subr.bf16.mxu0 0
    %1504 = vmatpush1.bf16.msra.mxu0 0
    %1505 = vmatprep.subr.bf16.mxu0 0
    %1506 = vmatpush1.bf16.msra.mxu0 0
    %1507 = vmatprep.subr.bf16.mxu0 0
    %1508 = vmatpush1.bf16.msra.mxu0 0
    %1509 = vmatprep.subr.bf16.mxu0 0
    %1510 = vmatpush1.bf16.msra.mxu0 0
    %1511 = vmatprep.subr.bf16.mxu0 0
    %1512 = vmatpush1.bf16.msra.mxu0 0
    %1513 = vmatprep.subr.bf16.mxu0 0
    %1514 = vmatpush1.bf16.msra.mxu0 0
    %1515 = vmatprep.subr.bf16.mxu0 0
    %1516 = vmatpush1.bf16.msra.mxu0 0
    %1517 = vmatprep.subr.bf16.mxu0 0
    %1518 = vmatpush1.bf16.msra.mxu0 0
    %1519 = vmatprep.subr.bf16.mxu0 0
    %1520 = vmatpush1.bf16.msra.mxu0 0
    %1521 = vmatprep.subr.bf16.mxu0 0
    %1522 = vmatpush1.bf16.msra.mxu0 0
    %1523 = vmatprep.mubr.bf16.mxu0 0
    %1524 = vmatmul.mubr.bf16.gmra.mrb[0].mxu0 %v1486
    %v1525 = vpop.f32.mrb[0].mxu0
    %v1526 = vadd.f32 0.0, %v1525
    %v1527 = vpop.f32.mrb[0].mxu0
    %v1528 = vpop.f32.mrb[0].mxu0
    %v1529 = vpop.f32.mrb[0].mxu0
    %1530 = vdwg.mxu0
    %1532 = vrot.lane.b32.xlu0 %v1430, 16
    %v1533 = vpop.permute.xlu0 %1532
    %v1535 = vsel %vm196, %v1382, %v1533
    %1537 = vrot.lane.b32.xlu0 %v1526, 16
    %v1538 = vpop.permute.xlu0 %1537
    %v1540 = vsel %vm196, %v1478, %v1538
    %v1541 = vpack.c.bf16 %v1540, %v1535
    %s1542 = scalar_lea.vmem %s6, 16
    %v1543 = vld [vmem:[%s1542] sm:$0xf]
    %v1544 = vld [vmem:[%s1542 + $0x4] sm:$0xf]
    %v1545 = vld [vmem:[%s1542 + $0x8] sm:$0xf]
    %v1546 = vld [vmem:[%s1542 + $0xc] sm:$0xf]
    %s1547 = scalar_lea.vmem %s7, 1
    %v1548 = vld [vmem:[%s1547] sm:$0x1]
    %v1550 = vlaneseq
    %v1551 = vshrl.u32 %v1550, 7
    %v1552 = vsub.s32 0, %v1551
    %v1553 = vrot.slane %v1548, %v1552
    %v1559 = vunpack.c.l.b16 %v1543
    %v1560 = vunpack.c.l.b16 %v1544
    %v1561 = vunpack.c.l.b16 %v1545
    %v1562 = vunpack.c.l.b16 %v1546
    %v1563 = vpack.c.b16 %v1560, %v1559
    %v1564 = vpack.c.b16 %v1562, %v1561
    %v1568 = vsel %vm65, %v1541, 0
    %1570 = vmatprep.subr.bf16.mxu0 0
    %1571 = vmatpush1.bf16.msra.mxu0 %v1563
    %1572 = vmatprep.subr.bf16.mxu0 0
    %1573 = vmatpush1.bf16.msra.mxu0 %v1564
    %1574 = vmatprep.subr.bf16.mxu0 0
    %1575 = vmatpush1.bf16.msra.mxu0 0
    %1576 = vmatprep.subr.bf16.mxu0 0
    %1577 = vmatpush1.bf16.msra.mxu0 0
    %1578 = vmatprep.subr.bf16.mxu0 0
    %1579 = vmatpush1.bf16.msra.mxu0 0
    %1580 = vmatprep.subr.bf16.mxu0 0
    %1581 = vmatpush1.bf16.msra.mxu0 0
    %1582 = vmatprep.subr.bf16.mxu0 0
    %1583 = vmatpush1.bf16.msra.mxu0 0
    %1584 = vmatprep.subr.bf16.mxu0 0
    %1585 = vmatpush1.bf16.msra.mxu0 0
    %1586 = vmatprep.subr.bf16.mxu0 0
    %1587 = vmatpush1.bf16.msra.mxu0 0
    %1588 = vmatprep.subr.bf16.mxu0 0
    %1589 = vmatpush1.bf16.msra.mxu0 0
    %1590 = vmatprep.subr.bf16.mxu0 0
    %1591 = vmatpush1.bf16.msra.mxu0 0
    %1592 = vmatprep.subr.bf16.mxu0 0
    %1593 = vmatpush1.bf16.msra.mxu0 0
    %1594 = vmatprep.subr.bf16.mxu0 0
    %1595 = vmatpush1.bf16.msra.mxu0 0
    %1596 = vmatprep.subr.bf16.mxu0 0
    %1597 = vmatpush1.bf16.msra.mxu0 0
    %1598 = vmatprep.subr.bf16.mxu0 0
    %1599 = vmatpush1.bf16.msra.mxu0 0
    %1600 = vmatprep.subr.bf16.mxu0 0
    %1601 = vmatpush1.bf16.msra.mxu0 0
    %1602 = vmatprep.mubr.bf16.mxu0 0
    %1603 = vmatmul.mubr.bf16.gmra.mrb[0].mxu0 %v1568
    %v1604 = vpop.f32.mrb[0].mxu0
    %v1605 = vadd.f32 %v1553, %v1604
    %v1606 = vpop.f32.mrb[0].mxu0
    %v1607 = vpop.f32.mrb[0].mxu0
    %v1608 = vadd.f32 %v1553, %v1607
    %v1609 = vpop.f32.mrb[0].mxu0
    %1610 = vdwg.mxu0
    %v1611 = vadd.f32 %v1605, %v1003
    %v1612 = vadd.f32 %v1608, %v1004
    %s1613 = scalar_lea.vmem %s8, 1
    %v1614 = vld [vmem:[%s1613] sm:$0x1]
    %s1615 = scalar_lea.vmem %s9, 1
    %v1616 = vld [vmem:[%s1615] sm:$0x1]
    %v1617 = vsel %vm65, %v1611, 0.0
    %1618 = vadd.xlane.f32.xlu0 %v1617
    %v1619 = vpop.xlane.xlu0 %1618
    %v1620 = vsel %vm65, %v1612, 0.0
    %1621 = vadd.xlane.f32.xlu0 %v1620
    %v1622 = vpop.xlane.xlu0 %1621
    %v1623 = vmul.f32 %v1619, %v72
    %v1624 = vmul.f32 %v1622, %v72
    %v1625 = vsub.f32 %v1611, %v1623
    %v1626 = vsub.f32 %v1612, %v1624
    %v1627 = vmul.f32 %v1625, %v1625
    %v1628 = vmul.f32 %v1626, %v1626
    %v1629 = vsel %vm65, %v1627, 0.0
    %1630 = vadd.xlane.f32.xlu0 %v1629
    %v1631 = vpop.xlane.xlu0 %1630
    %v1632 = vsel %vm65, %v1628, 0.0
    %1633 = vadd.xlane.f32.xlu0 %v1632
    %v1634 = vpop.xlane.xlu0 %1633
    %v1635 = vmul.f32 %v1631, %v72
    %v1636 = vmul.f32 %v1634, %v72
    %v1637 = vadd.f32 %v1635, 1e-12
    %v1638 = vadd.f32 %v1636, 1e-12
    %v1639 = vrsqrt.pop %v1637
    %v1640 = vrsqrt.pop %v1638
    %v1641 = vmul.f32 %v1625, %v1639
    %v1642 = vmul.f32 %v1626, %v1640
    %v1644 = vlaneseq
    %v1645 = vshrl.u32 %v1644, 7
    %v1646 = vsub.s32 0, %v1645
    %v1647 = vrot.slane %v1614, %v1646
    %v1649 = vmul.f32 %v1641, %v1647
    %v1650 = vmul.f32 %v1642, %v1647
    %v1652 = vlaneseq
    %v1653 = vshrl.u32 %v1652, 7
    %v1654 = vsub.s32 0, %v1653
    %v1655 = vrot.slane %v1616, %v1654
    %v1657 = vadd.f32 %v1649, %v1655
    %v1658 = vadd.f32 %v1650, %v1655
    %v1659 = vpack.c.bf16 %v1658, %v1657
    %s1660 = scalar_lea.vmem %s10, 16
    %v1661 = vld [vmem:[%s1660] sm:$0xf]
    %v1662 = vld [vmem:[%s1660 + $0x4] sm:$0xf]
    %v1663 = vld [vmem:[%s1660 + $0x8] sm:$0xf]
    %v1664 = vld [vmem:[%s1660 + $0xc] sm:$0xf]
    %s1665 = scalar_lea.vmem %s11, 1
    %v1666 = vld [vmem:[%s1665] sm:$0x1]
    %v1668 = vlaneseq
    %v1669 = vshrl.u32 %v1668, 7
    %v1670 = vsub.s32 0, %v1669
    %v1671 = vrot.slane %v1666, %v1670
    %v1677 = vunpack.c.l.b16 %v1661
    %v1678 = vunpack.c.l.b16 %v1662
    %v1679 = vunpack.c.l.b16 %v1663
    %v1680 = vunpack.c.l.b16 %v1664
    %v1681 = vpack.c.b16 %v1678, %v1677
    %v1682 = vpack.c.b16 %v1680, %v1679
    %v1686 = vsel %vm65, %v1659, 0
    %1688 = vmatprep.subr.bf16.mxu0 0
    %1689 = vmatpush1.bf16.msra.mxu0 %v1681
    %1690 = vmatprep.subr.bf16.mxu0 0
    %1691 = vmatpush1.bf16.msra.mxu0 %v1682
    %1692 = vmatprep.subr.bf16.mxu0 0
    %1693 = vmatpush1.bf16.msra.mxu0 0
    %1694 = vmatprep.subr.bf16.mxu0 0
    %1695 = vmatpush1.bf16.msra.mxu0 0
    %1696 = vmatprep.subr.bf16.mxu0 0
    %1697 = vmatpush1.bf16.msra.mxu0 0
    %1698 = vmatprep.subr.bf16.mxu0 0
    %1699 = vmatpush1.bf16.msra.mxu0 0
    %1700 = vmatprep.subr.bf16.mxu0 0
    %1701 = vmatpush1.bf16.msra.mxu0 0
    %1702 = vmatprep.subr.bf16.mxu0 0
    %1703 = vmatpush1.bf16.msra.mxu0 0
    %1704 = vmatprep.subr.bf16.mxu0 0
    %1705 = vmatpush1.bf16.msra.mxu0 0
    %1706 = vmatprep.subr.bf16.mxu0 0
    %1707 = vmatpush1.bf16.msra.mxu0 0
    %1708 = vmatprep.subr.bf16.mxu0 0
    %1709 = vmatpush1.bf16.msra.mxu0 0
    %1710 = vmatprep.subr.bf16.mxu0 0
    %1711 = vmatpush1.bf16.msra.mxu0 0
    %1712 = vmatprep.subr.bf16.mxu0 0
    %1713 = vmatpush1.bf16.msra.mxu0 0
    %1714 = vmatprep.subr.bf16.mxu0 0
    %1715 = vmatpush1.bf16.msra.mxu0 0
    %1716 = vmatprep.subr.bf16.mxu0 0
    %1717 = vmatpush1.bf16.msra.mxu0 0
    %1718 = vmatprep.subr.bf16.mxu0 0
    %1719 = vmatpush1.bf16.msra.mxu0 0
    %1720 = vmatprep.mubr.bf16.mxu0 0
    %1721 = vmatmul.mubr.bf16.gmra.mrb[0].mxu0 %v1686
    %v1722 = vpop.f32.mrb[0].mxu0
    %v1723 = vadd.f32 %v1671, %v1722
    %v1724 = vpop.f32.mrb[0].mxu0
    %v1725 = vpop.f32.mrb[0].mxu0
    %v1726 = vadd.f32 %v1671, %v1725
    %v1727 = vpop.f32.mrb[0].mxu0
    %1728 = vdwg.mxu0
    %v1729 = vmul.f32 %v1723, 0.5
    %v1730 = vmul.f32 %v1726, 0.5
    %v1731 = vmul.f32 %v1723, 0.044715
    %v1732 = vmul.f32 %v1726, 0.044715
    %v1733 = vmul.f32 %v1731, %v1723
    %v1734 = vmul.f32 %v1732, %v1726
    %v1735 = vmul.f32 %v1733, %v1723
    %v1736 = vmul.f32 %v1734, %v1726
    %v1737 = vadd.f32 %v1723, %v1735
    %v1738 = vadd.f32 %v1726, %v1736
    %v1739 = vmul.f32 %v1737, 0.7978846
    %v1740 = vmul.f32 %v1738, 0.7978846
    %v1741 = vtanh.pop %v1739
    %v1742 = vtanh.pop %v1740
    %v1743 = vadd.f32 %v1741, 1.0
    %v1744 = vadd.f32 %v1742, 1.0
    %v1745 = vmul.f32 %v1729, %v1743
    %v1746 = vmul.f32 %v1730, %v1744
    %v1747 = vpack.c.bf16 %v1746, %v1745
    %s1748 = scalar_lea.vmem %s12, 32
    %v1749 = vld [vmem:[%s1748] sm:$0xf]
    %v1750 = vld [vmem:[%s1748 + $0x4] sm:$0xf]
    %v1751 = vld [vmem:[%s1748 + $0x8] sm:$0xf]
    %v1752 = vld [vmem:[%s1748 + $0xc] sm:$0xf]
    %v1753 = vld [vmem:[%s1748 + $0x10] sm:$0xf]
    %v1754 = vld [vmem:[%s1748 + $0x14] sm:$0xf]
    %v1755 = vld [vmem:[%s1748 + $0x18] sm:$0xf]
    %v1756 = vld [vmem:[%s1748 + $0x1c] sm:$0xf]
    %s1757 = scalar_lea.vmem %s13, 1
    %v1758 = vld [vmem:[%s1757] sm:$0x1]
    %v1760 = vlaneseq
    %v1761 = vshrl.u32 %v1760, 7
    %v1762 = vsub.s32 0, %v1761
    %v1763 = vrot.slane %v1758, %v1762
    %v1773 = vunpack.c.l.b16 %v1749
    %v1774 = vunpack.c.l.b16 %v1750
    %v1775 = vunpack.c.l.b16 %v1751
    %v1776 = vunpack.c.l.b16 %v1752
    %v1777 = vunpack.c.l.b16 %v1753
    %v1778 = vunpack.c.l.b16 %v1754
    %v1779 = vunpack.c.l.b16 %v1755
    %v1780 = vunpack.c.l.b16 %v1756
    %v1781 = vpack.c.b16 %v1774, %v1773
    %v1782 = vpack.c.b16 %v1776, %v1775
    %v1783 = vpack.c.b16 %v1778, %v1777
    %v1784 = vpack.c.b16 %v1780, %v1779
    %v1790 = vsel %vm914, %v1747, 0
    %1792 = vmatprep.subr.bf16.mxu0 0
    %1793 = vmatpush1.bf16.msra.mxu0 %v1781
    %1794 = vmatprep.subr.bf16.mxu0 0
    %1795 = vmatpush1.bf16.msra.mxu0 %v1782
    %1796 = vmatprep.subr.bf16.mxu0 0
    %1797 = vmatpush1.bf16.msra.mxu0 %v1783
    %1798 = vmatprep.subr.bf16.mxu0 0
    %1799 = vmatpush1.bf16.msra.mxu0 %v1784
    %1800 = vmatprep.subr.bf16.mxu0 0
    %1801 = vmatpush1.bf16.msra.mxu0 0
    %1802 = vmatprep.subr.bf16.mxu0 0
    %1803 = vmatpush1.bf16.msra.mxu0 0
    %1804 = vmatprep.subr.bf16.mxu0 0
    %1805 = vmatpush1.bf16.msra.mxu0 0
    %1806 = vmatprep.subr.bf16.mxu0 0
    %1807 = vmatpush1.bf16.msra.mxu0 0
    %1808 = vmatprep.subr.bf16.mxu0 0
    %1809 = vmatpush1.bf16.msra.mxu0 0
    %1810 = vmatprep.subr.bf16.mxu0 0
    %1811 = vmatpush1.bf16.msra.mxu0 0
    %1812 = vmatprep.subr.bf16.mxu0 0
    %1813 = vmatpush1.bf16.msra.mxu0 0
    %1814 = vmatprep.subr.bf16.mxu0 0
    %1815 = vmatpush1.bf16.msra.mxu0 0
    %1816 = vmatprep.subr.bf16.mxu0 0
    %1817 = vmatpush1.bf16.msra.mxu0 0
    %1818 = vmatprep.subr.bf16.mxu0 0
    %1819 = vmatpush1.bf16.msra.mxu0 0
    %1820 = vmatprep.subr.bf16.mxu0 0
    %1821 = vmatpush1.bf16.msra.mxu0 0
    %1822 = vmatprep.subr.bf16.mxu0 0
    %1823 = vmatpush1.bf16.msra.mxu0 0
    %1824 = vmatprep.mubr.bf16.mxu0 0
    %1825 = vmatmul.mubr.bf16.gmra.mrb[0].mxu0 %v1790
    %v1826 = vpop.f32.mrb[0].mxu0
    %v1827 = vadd.f32 %v1763, %v1826
    %v1828 = vpop.f32.mrb[0].mxu0
    %v1829 = vpop.f32.mrb[0].mxu0
    %v1830 = vadd.f32 %v1763, %v1829
    %v1831 = vpop.f32.mrb[0].mxu0
    %1832 = vdwg.mxu0
    %v1833 = vadd.f32 %v1827, %v1657
    %v1834 = vadd.f32 %v1830, %v1658
    %s1835 = scalar_lea.vmem %s14, 1
    %v1836 = vld [vmem:[%s1835] sm:$0x1]
    %s1837 = scalar_lea.vmem %s15, 1
    %v1838 = vld [vmem:[%s1837] sm:$0x1]
    %v1839 = vsel %vm65, %v1833, 0.0
    %1840 = vadd.xlane.f32.xlu0 %v1839
    %v1841 = vpop.xlane.xlu0 %1840
    %v1842 = vsel %vm65, %v1834, 0.0
    %1843 = vadd.xlane.f32.xlu0 %v1842
    %v1844 = vpop.xlane.xlu0 %1843
    %v1845 = vmul.f32 %v1841, %v72
    %v1846 = vmul.f32 %v1844, %v72
    %v1847 = vsub.f32 %v1833, %v1845
    %v1848 = vsub.f32 %v1834, %v1846
    %v1849 = vmul.f32 %v1847, %v1847
    %v1850 = vmul.f32 %v1848, %v1848
    %v1851 = vsel %vm65, %v1849, 0.0
    %1852 = vadd.xlane.f32.xlu0 %v1851
    %v1853 = vpop.xlane.xlu0 %1852
    %v1854 = vsel %vm65, %v1850, 0.0
    %1855 = vadd.xlane.f32.xlu0 %v1854
    %v1856 = vpop.xlane.xlu0 %1855
    %v1857 = vmul.f32 %v1853, %v72
    %v1858 = vmul.f32 %v1856, %v72
    %v1859 = vadd.f32 %v1857, 1e-12
    %v1860 = vadd.f32 %v1858, 1e-12
    %v1861 = vrsqrt.pop %v1859
    %v1862 = vrsqrt.pop %v1860
    %v1863 = vmul.f32 %v1847, %v1861
    %v1864 = vmul.f32 %v1848, %v1862
    %v1866 = vlaneseq
    %v1867 = vshrl.u32 %v1866, 7
    %v1868 = vsub.s32 0, %v1867
    %v1869 = vrot.slane %v1836, %v1868
    %v1871 = vmul.f32 %v1863, %v1869
    %v1872 = vmul.f32 %v1864, %v1869
    %v1874 = vlaneseq
    %v1875 = vshrl.u32 %v1874, 7
    %v1876 = vsub.s32 0, %v1875
    %v1877 = vrot.slane %v1838, %v1876
    %v1879 = vadd.f32 %v1871, %v1877
    %v1880 = vadd.f32 %v1872, %v1877
    %v1882 = vrot.slane %v1880, 7
    %vm1884 = vcmask 1040384
    %v1885 = vsel %vm1884, %v1879, %v1882
    %v1886 = vpack.c.bf16 %v1885, %v1885
    %v1887 = vld [vmem:[%s16] sm:$0xf]
    %v1888 = vld [vmem:[%s16 + $0x4] sm:$0xf]
    %v1889 = vld [vmem:[%s16 + $0x8] sm:$0xf]
    %v1890 = vld [vmem:[%s16 + $0xc] sm:$0xf]
    %v1891 = vld [vmem:[%s17] sm:$0x1]
    %v1893 = vlaneseq
    %v1894 = vshrl.u32 %v1893, 7
    %v1895 = vsub.s32 0, %v1894
    %v1896 = vrot.slane %v1891, %v1895
    %v1902 = vunpack.c.l.b16 %v1887
    %v1903 = vunpack.c.l.b16 %v1888
    %v1904 = vunpack.c.l.b16 %v1889
    %v1905 = vunpack.c.l.b16 %v1890
    %v1906 = vpack.c.b16 %v1903, %v1902
    %v1907 = vpack.c.b16 %v1905, %v1904
    %v1911 = vsel %vm65, %v1886, 0
    %1913 = vmatprep.subr.bf16.mxu0 0
    %1914 = vmatpush1.bf16.msra.mxu0 %v1906
    %1915 = vmatprep.subr.bf16.mxu0 0
    %1916 = vmatpush1.bf16.msra.mxu0 %v1907
    %1917 = vmatprep.subr.bf16.mxu0 0
    %1918 = vmatpush1.bf16.msra.mxu0 0
    %1919 = vmatprep.subr.bf16.mxu0 0
    %1920 = vmatpush1.bf16.msra.mxu0 0
    %1921 = vmatprep.subr.bf16.mxu0 0
    %1922 = vmatpush1.bf16.msra.mxu0 0
    %1923 = vmatprep.subr.bf16.mxu0 0
    %1924 = vmatpush1.bf16.msra.mxu0 0
    %1925 = vmatprep.subr.bf16.mxu0 0
    %1926 = vmatpush1.bf16.msra.mxu0 0
    %1927 = vmatprep.subr.bf16.mxu0 0
    %1928 = vmatpush1.bf16.msra.mxu0 0
    %1929 = vmatprep.subr.bf16.mxu0 0
    %1930 = vmatpush1.bf16.msra.mxu0 0
    %1931 = vmatprep.subr.bf16.mxu0 0
    %1932 = vmatpush1.bf16.msra.mxu0 0
    %1933 = vmatprep.subr.bf16.mxu0 0
    %1934 = vmatpush1.bf16.msra.mxu0 0
    %1935 = vmatprep.subr.bf16.mxu0 0
    %1936 = vmatpush1.bf16.msra.mxu0 0
    %1937 = vmatprep.subr.bf16.mxu0 0
    %1938 = vmatpush1.bf16.msra.mxu0 0
    %1939 = vmatprep.subr.bf16.mxu0 0
    %1940 = vmatpush1.bf16.msra.mxu0 0
    %1941 = vmatprep.subr.bf16.mxu0 0
    %1942 = vmatpush1.bf16.msra.mxu0 0
    %1943 = vmatprep.subr.bf16.mxu0 0
    %1944 = vmatpush1.bf16.msra.mxu0 0
    %1945 = vmatprep.mubr.bf16.mxu0 0
    %1946 = vmatmul.mubr.bf16.gmra.mrb[0].mxu0 %v1911
    %v1947 = vpop.f32.mrb[0].mxu0
    %v1948 = vadd.f32 %v1896, %v1947
    %v1949 = vpop.f32.mrb[0].mxu0
    %v1950 = vpop.f32.mrb[0].mxu0
    %v1951 = vpop.f32.mrb[0].mxu0
    %1952 = vdwg.mxu0
    %v1953 = vtanh.pop %v1948
    %vm1954 = vcmask 254976
    %1955 = vst.msk [vmem:[#allocation2] sm:$0x3] %vm1954, %v1953
    // Predicated region
    $region74: #{bert_forward.1} parent=1 // pred_check
      _
    $region75: #{bert_forward.1} parent=1 // pred_check_branch
      %1957 = sbr.rel (0) target = $region77
    $region76: #{bert_forward.1} parent=1 // pred_region
      %s1959 = ssub.s32 32, 32
      %1960 = vsyncadd [#allocation3], %s1959
      %s1962 = sshll.u32 [#allocation2], 4
      %s1963 = int_to_ptr.vmem [resolvable:$true] %s1962
      %1965 = dma.vmem_to_hbm [thread:$0]  %s1963, 32, %s18, [#allocation3]
    $region77: #{bert_forward.1} parent=1 // pred_fallthru
      _
    // Predicated region
    $region78: #{bert_forward.1} parent=1 // pred_check
      _
    $region79: #{bert_forward.1} parent=1 // pred_check_branch
      %1967 = sbr.rel (0) target = $region81
    $region80: #{bert_forward.1} parent=1 // pred_region
      %1968 = dma.done [#allocation3], 32
    $region81: #{bert_forward.1} parent=1 // pred_fallthru
      _
    %1969 = vsyncpa [#allocation3], 1

</llo_original>
